<compile_context>
chip_gen: v7x
topology: tpu7x:2x2x1
jax: 0.10.0
libtpu: 0.0.40
codegen_flags: <defaults>
</compile_context>

<pallas_src>
import functools

import numpy as np
import jax
import jax.numpy as jnp
from jax import lax
from jax.experimental import pallas as pl
from jax.experimental.pallas import tpu as pltpu

BN_EPS = 1e-5
K = 3                       # depthwise kernel size (ksize=3)
MXU_DTYPE = jnp.bfloat16    # 1x1-conv (MXU) operand dtype; accumulation stays f32.


def _round_up(x, m):
    return (x + m - 1) // m * m


# --------------------------------------------------------------------------
# Fused block kernels (one pallas_call per ShuffleV2 block)
# --------------------------------------------------------------------------

def _proj_block_kernel(x_ref, fc_w_ref, dw_w_ref, dw_b_ref, pdw_w_ref, pdw_b_ref,
                       pw2_w_ref, pw2_b_ref, o_ref, fcpad_ref, dwacc_ref,
                       *, s, Hph, Wphp, Ho, Wo, bt):
    """First (proj=True) ShuffleV2 block, fully fused; `bt` images per grid step.

    x_ref     : (bt, s, s, Hph, Wphp, Cin) phase-decomposed, zero-padded NHWC input
    fcpad_ref : (bt, s, s, Hph, Wphp, mid) VMEM: ReLU(fc(x)) in the same padded layout
    dwacc_ref : (bt, Ho*Wo, Cin+mid)       VMEM: [proj-dw | main-dw] per output pixel
    o_ref     : (bt, Ho*Wo, Cout)          flat NHWC output, channels = [proj | main]
    """
    cin = x_ref.shape[-1]
    mid = fc_w_ref.shape[-1]

    # ---- main-branch fc 1x1 + ReLU: ONE MXU pass over the whole padded slab.
    #      Padded rows are zero and fc has no bias, so zero padding survives the conv.
    #      Wphp % 8 == 0 -> both reshapes below are tiling-preserving (free).
    rows_in = bt * s * s * Hph * Wphp
    x_all = x_ref[...].reshape(rows_in, cin)
    fc = jnp.dot(x_all.astype(fc_w_ref.dtype), fc_w_ref[...],
                 preferred_element_type=jnp.float32)
    fcpad_ref[...] = jnp.maximum(fc, 0.0).reshape(fcpad_ref.shape)

    # ---- 3x3 depthwise (stride s) + folded BN, both branches, whole-plane taps.
    acc_m = jnp.zeros((bt, Ho, Wo, mid), jnp.float32)
    acc_p = jnp.zeros((bt, Ho, Wo, cin), jnp.float32)
    for dh in range(K):
        ph, rh = dh % s, dh // s
        for dw in range(K):
            pw_, rw = dw % s, dw // s
            acc_m = acc_m + (fcpad_ref[:, ph, pw_, rh:rh + Ho, rw:rw + Wo, :]
                             * dw_w_ref[dh, dw, :])
            acc_p = acc_p + (x_ref[:, ph, pw_, rh:rh + Ho, rw:rw + Wo, :]
                             * pdw_w_ref[dh, dw, :])
    acc_m = acc_m + dw_b_ref[0, :]          # biases added once (hoisted out of row loops)
    acc_p = acc_p + pdw_b_ref[0, :]

    # ---- flatten the spatial plane via VMEM row stores (avoids a non-tiling reshape).
    for b in range(bt):
        for i in range(Ho):
            dwacc_ref[b, i * Wo:(i + 1) * Wo, :cin] = acc_p[b, i]
            dwacc_ref[b, i * Wo:(i + 1) * Wo, cin:] = acc_m[b, i]

    # ---- fused pw 1x1 for BOTH branches (weights embedded into disjoint output-channel
    #      halves -> the channel concat is just a sum) + bias + ReLU + ONE contiguous store.
    rows_out = bt * Ho * Wo
    y = jnp.dot(dwacc_ref[...].reshape(rows_out, cin + mid).astype(pw2_w_ref.dtype),
                pw2_w_ref[...], preferred_element_type=jnp.float32) + pw2_b_ref[0, :]
    o_ref[...] = jnp.maximum(y, 0.0).reshape(o_ref.shape).astype(o_ref.dtype)


def _shuffle_block_kernel(x_ref, fused1_w_ref, dw_w_ref, dw_b_ref, pw_w_ref, pw_b_ref,
                          o_ref, pad_ref, dwacc_ref, *, H, W, bt):
    """Non-proj ShuffleV2 block (stride 1), fully fused; `bt` images per grid step.

    x_ref      : (bt, H*W, C)        flat NHWC input (previous block's output)
    fused1_w   : (C, mid+Cout)       [fc (odd channels folded in) | passthrough selection]
    pad_ref    : (bt, H+2, W+2, mid) VMEM: zero-padded ReLU(fc(x_odd))
    dwacc_ref  : (bt, H*W, mid)      VMEM: staging for fc rows, then flat depthwise output
    o_ref      : (bt, H*W, Cout)     flat output, channels = [even passthrough | main]
    """
    C = x_ref.shape[-1]
    mid = dw_b_ref.shape[-1]
    N = H * W                                       # N % 8 == 0 -> reshapes below are free

    # ---- fused fc + passthrough-selection matmul: ONE MXU pass on the shared LHS.
    x_all = x_ref[...].reshape(bt * N, C)
    y01 = jnp.dot(x_all.astype(fused1_w_ref.dtype), fused1_w_ref[...],
                  preferred_element_type=jnp.float32)       # (bt*N, mid + Cout)
    fc = jnp.maximum(y01[:, :mid], 0.0)
    y_pass = y01[:, mid:]                                   # even channels, embedded in Cout

    # ---- place ReLU(fc) into the zero-padded spatial scratch (memory-side reshape).
    dwacc_ref[...] = fc.reshape(dwacc_ref.shape)            # staging buffer, reused below
    pad_ref[...] = jnp.zeros(pad_ref.shape, pad_ref.dtype)
    for b in range(bt):
        for h in range(H):
            r = h * W
            pad_ref[b, h + 1, 1:W + 1, :] = dwacc_ref[b, r:r + W, :]

    # ---- 3x3 depthwise (stride 1) + folded BN, whole-plane taps.
    acc = jnp.zeros((bt, H, W, mid), jnp.float32)
    for dh in range(K):
        for dw in range(K):
            acc = acc + pad_ref[:, dh:dh + H, dw:dw + W, :] * dw_w_ref[dh, dw, :]
    acc = acc + dw_b_ref[0, :]

    for b in range(bt):
        for h in range(H):
            dwacc_ref[b, h * W:(h + 1) * W, :] = acc[b, h]

    # ---- pw 1x1 + folded BN + ReLU (embedded in the main channel half) + passthrough:
    #      one matmul, one bias add, ONE lane-contiguous store.
    y_main = jnp.dot(dwacc_ref[...].reshape(bt * N, mid).astype(pw_w_ref.dtype),
                     pw_w_ref[...], preferred_element_type=jnp.float32) + pw_b_ref[0, :]
    out = y_pass + jnp.maximum(y_main, 0.0)
    o_ref[...] = out.reshape(o_ref.shape).astype(o_ref.dtype)


# --------------------------------------------------------------------------
# Wrappers (one pallas_call per block)
# --------------------------------------------------------------------------

def _const_spec(arr):
    """Whole-array block, constant across the batch grid (weights)."""
    nd = arr.ndim
    return pl.BlockSpec(arr.shape, lambda b, _nd=nd: (0,) * _nd)


def _batch_tiling(B):
    """Whole batch per pallas_call, split into >=2 'parallel' grid steps when possible
    (v7x has 2 TensorCores; v5e/v6e simply run the steps back-to-back)."""
    if B >= 2 and B % 2 == 0:
        return B // 2, 2
    return 1, B


def _run_proj_block(x_nhwc, q, stride):
    B, H, W, cin = x_nhwc.shape
    pad = K // 2
    Ho = (H + 2 * pad - K) // stride + 1
    Wo = (W + 2 * pad - K) // stride + 1
    Hph = (K - 1) // stride + Ho
    Wph = (K - 1) // stride + Wo
    Wphp = _round_up(Wph, 8)              # keep in-kernel reshapes tiling-preserving
    Hp, Wp = stride * Hph, stride * Wphp
    # one XLA prologue pass (fused with the NCHW->NHWC transpose): pad + phase-decompose.
    xp = jnp.pad(x_nhwc, ((0, 0), (pad, Hp - H - pad), (pad, Wp - W - pad), (0, 0)))
    # xph[b, ph, pw, a, c, :] == xp[b, ph + stride*a, pw + stride*c, :]
    xph = xp.reshape(B, Hph, stride, Wphp, stride, cin).transpose(0, 2, 4, 1, 3, 5)

    mid = q['fc_w'].shape[1]
    cout = q['pw2_w'].shape[1]
    weights = [q['fc_w'], q['dw_w'], q['dw_b'], q['pdw_w'], q['pdw_b'],
               q['pw2_w'], q['pw2_b']]
    bt, steps = _batch_tiling(B)

    rows_in = stride * stride * Hph * Wphp
    flops = B * (2 * rows_in * cin * mid + 18 * Ho * Wo * (mid + cin)
                 + 2 * Ho * Wo * (cin + mid) * cout)
    bytes_acc = 4 * (int(xph.size) + B * Ho * Wo * cout) \
        + sum(int(w.size) * w.dtype.itemsize for w in weights)

    out = pl.pallas_call(
        functools.partial(_proj_block_kernel, s=stride, Hph=Hph, Wphp=Wphp,
                          Ho=Ho, Wo=Wo, bt=bt),
        out_shape=jax.ShapeDtypeStruct((B, Ho * Wo, cout), x_nhwc.dtype),
        grid=(steps,),
        in_specs=[pl.BlockSpec((bt, stride, stride, Hph, Wphp, cin),
                               lambda b: (b, 0, 0, 0, 0, 0))]
                 + [_const_spec(w) for w in weights],
        out_specs=pl.BlockSpec((bt, Ho * Wo, cout), lambda b: (b, 0, 0)),
        scratch_shapes=[pltpu.VMEM((bt, stride, stride, Hph, Wphp, mid), jnp.float32),
                        pltpu.VMEM((bt, Ho * Wo, cin + mid), jnp.float32)],
        compiler_params=pltpu.CompilerParams(
            dimension_semantics=("parallel",),
            vmem_limit_bytes=32 * 1024 * 1024),
        cost_estimate=pl.CostEstimate(flops=int(flops), transcendentals=0,
                                      bytes_accessed=int(bytes_acc)),
    )(xph, *weights)
    return out, Ho, Wo


def _run_shuffle_block(x_flat, q, H, W):
    B, N, C = x_flat.shape
    mid = q['dw_b'].shape[-1]
    cout = q['pw_w'].shape[1]
    weights = [q['fused1_w'], q['dw_w'], q['dw_b'], q['pw_w'], q['pw_b']]
    bt, steps = _batch_tiling(B)

    flops = B * N * (2 * C * (mid + cout) + 18 * mid + 2 * mid * cout)
    bytes_acc = 4 * (int(x_flat.size) + B * N * cout) \
        + sum(int(w.size) * w.dtype.itemsize for w in weights)

    return pl.pallas_call(
        functools.partial(_shuffle_block_kernel, H=H, W=W, bt=bt),
        out_shape=jax.ShapeDtypeStruct((B, N, cout), x_flat.dtype),
        grid=(steps,),
        in_specs=[pl.BlockSpec((bt, N, C), lambda b: (b, 0, 0))]
                 + [_const_spec(w) for w in weights],
        out_specs=pl.BlockSpec((bt, N, cout), lambda b: (b, 0, 0)),
        scratch_shapes=[pltpu.VMEM((bt, H + 2, W + 2, mid), jnp.float32),
                        pltpu.VMEM((bt, N, mid), jnp.float32)],
        compiler_params=pltpu.CompilerParams(
            dimension_semantics=("parallel",),
            vmem_limit_bytes=32 * 1024 * 1024),
        cost_estimate=pl.CostEstimate(flops=int(flops), transcendentals=0,
                                      bytes_accessed=int(bytes_acc)),
    )(x_flat, *weights)


# --------------------------------------------------------------------------
# One-time trace/init-time weight folding (off the per-call critical path)
# --------------------------------------------------------------------------

def fold_block_params(p, proj, w_out):
    """Fold eval-mode BN into conv weights, fold channel_shuffle into fc/selection weights,
    embed each branch's 1x1 conv into its slice of the concatenated output-channel range
    (so the concat becomes a sum), and cast MXU weights to bf16."""
    inp = p['fc_w'].shape[0]
    mid = p['fc_w'].shape[1]
    c_main = p['pw_w'].shape[1]
    q = {}
    q['dw_w'] = (p['dw_w'] * p['dw_scale']).astype(jnp.float32)
    q['dw_b'] = p['dw_bias'].reshape(1, mid).astype(jnp.float32)
    pw = p['pw_w'] * p['pw_scale'][None, :]
    if proj:
        q['fc_w'] = p['fc_w'].astype(MXU_DTYPE)
        q['pdw_w'] = (p['pdw_w'] * p['pdw_scale']).astype(jnp.float32)
        q['pdw_b'] = p['pdw_bias'].reshape(1, inp).astype(jnp.float32)
        ppw = p['ppw_w'] * p['ppw_scale'][None, :]
        pw2 = jnp.zeros((inp + mid, w_out), jnp.float32)
        pw2 = pw2.at[:inp, :inp].set(ppw)                   # proj branch -> channels [0:inp)
        pw2 = pw2.at[inp:, w_out - c_main:].set(pw)         # main branch -> channels [inp:)
        q['pw2_w'] = pw2.astype(MXU_DTYPE)
        pb = jnp.zeros((1, w_out), jnp.float32)
        pb = pb.at[0, :inp].set(p['ppw_bias'])
        pb = pb.at[0, w_out - c_main:].set(p['pw_bias'])
        q['pw2_b'] = pb
    else:
        C = 2 * inp
        # channel_shuffle: odd channels -> main (fold into fc rows), even -> passthrough.
        fc_full = jnp.zeros((C, mid), jnp.float32).at[1::2, :].set(p['fc_w'])
        sel = jnp.zeros((C, w_out), jnp.float32).at[
            jnp.arange(0, C, 2), jnp.arange(inp)].set(1.0)
        q['fused1_w'] = jnp.concatenate([fc_full, sel], axis=1).astype(MXU_DTYPE)
        q['pw_w'] = jnp.zeros((mid, w_out), jnp.float32).at[
            :, w_out - c_main:].set(pw).astype(MXU_DTYPE)
        q['pw_b'] = jnp.zeros((1, w_out), jnp.float32).at[0, w_out - c_main:].set(p['pw_bias'])
    return q


# --------------------------------------------------------------------------
# ShuffleStage forward (Pallas path), NCHW in/out like the PyTorch module
# --------------------------------------------------------------------------

def shuffle_stage_forward(x_nchw, folded_params, s):
    x = jnp.transpose(x_nchw, (0, 2, 3, 1))                  # NCHW -> NHWC
    y, Ho, Wo = _run_proj_block(x, folded_params[0], s)      # flat (B, Ho*Wo, w_out)
    for q in folded_params[1:]:
        y = _run_shuffle_block(y, q, Ho, Wo)
    B = x_nchw.shape[0]
    w_out = y.shape[-1]
    return jnp.transpose(y.reshape(B, Ho, Wo, w_out), (0, 3, 1, 2))   # -> NCHW


# --------------------------------------------------------------------------
# Pure-JAX reference (uses the raw, un-folded f32 params)
# --------------------------------------------------------------------------

def _ref_dw(x, w, scale, bias, stride):
    C = x.shape[-1]
    y = lax.conv_general_dilated(
        x, w.reshape(3, 3, 1, C),
        window_strides=(stride, stride), padding=((1, 1), (1, 1)),
        dimension_numbers=('NHWC', 'HWIO', 'NHWC'), feature_group_count=C)
    return y * scale + bias


def _ref_pw(x, w, scale, bias, relu):
    y = jnp.einsum('bhwc,cd->bhwd', x, w) * scale + bias
    return jnp.maximum(y, 0.0) if relu else y


def _ref_block(x, params, stride, proj):
    if proj:
        x_proj, x_main = x, x
    else:
        x_proj, x_main = x[..., 0::2], x[..., 1::2]
    mid = params['fc_w'].shape[1]
    y = _ref_pw(x_main, params['fc_w'], jnp.ones((mid,)), jnp.zeros((mid,)), True)
    y = _ref_dw(y, params['dw_w'], params['dw_scale'], params['dw_bias'], stride)
    y = _ref_pw(y, params['pw_w'], params['pw_scale'], params['pw_bias'], True)
    if proj:
        x_proj = _ref_dw(x_proj, params['pdw_w'], params['pdw_scale'], params['pdw_bias'], stride)
        x_proj = _ref_pw(x_proj, params['ppw_w'], params['ppw_scale'], params['ppw_bias'], True)
    return jnp.concatenate([x_proj, y], axis=-1)


def ref_stage(x_nchw, stage_params, s):
    x = jnp.transpose(x_nchw, (0, 2, 3, 1))
    for i, p in enumerate(stage_params):
        x = _ref_block(x, p, stride=(s if i == 0 else 1), proj=(i == 0))
    return jnp.transpose(x, (0, 3, 1, 2))


# --------------------------------------------------------------------------
# Deterministic parameter init
# --------------------------------------------------------------------------

def _init_bn(key, c):
    k1, k2, k3, k4 = jax.random.split(key, 4)
    gamma = jax.random.uniform(k1, (c,), minval=0.5, maxval=1.5)
    beta = jax.random.normal(k2, (c,)) * 0.1
    mean = jax.random.normal(k3, (c,)) * 0.1
    var = jax.random.uniform(k4, (c,), minval=0.5, maxval=1.5)
    scale = gamma / jnp.sqrt(var + BN_EPS)
    bias = beta - mean * scale
    return scale.astype(jnp.float32), bias.astype(jnp.float32)


def init_block_params(key, inp, oup, mid, proj):
    ks = jax.random.split(key, 9)
    p = {}
    p['fc_w'] = (jax.random.normal(ks[0], (inp, mid)) * 0.1).astype(jnp.float32)
    p['dw_w'] = (jax.random.normal(ks[1], (3, 3, mid)) * 0.1).astype(jnp.float32)
    p['dw_scale'], p['dw_bias'] = _init_bn(ks[2], mid)
    p['pw_w'] = (jax.random.normal(ks[3], (mid, oup - inp)) * 0.1).astype(jnp.float32)
    p['pw_scale'], p['pw_bias'] = _init_bn(ks[4], oup - inp)
    if proj:
        p['pdw_w'] = (jax.random.normal(ks[5], (3, 3, inp)) * 0.1).astype(jnp.float32)
        p['pdw_scale'], p['pdw_bias'] = _init_bn(ks[6], inp)
        p['ppw_w'] = (jax.random.normal(ks[7], (inp, inp)) * 0.1).astype(jnp.float32)
        p['ppw_scale'], p['ppw_bias'] = _init_bn(ks[8], inp)
    return p


# --------------------------------------------------------------------------
# Main
# --------------------------------------------------------------------------

if __name__ == "__main__":
    # ShuffleStage(w_in=16, w_out=32, d=2, s=2) on an NCHW input of (2, 16, 8, 8)
    B, w_in, H, W = 2, 16, 8, 8
    w_out, d, s = 32, 2, 2

    key = jax.random.PRNGKey(0)
    kx, kp = jax.random.split(key)
    x = jax.random.normal(kx, (B, w_in, H, W), dtype=jnp.float32)   # NCHW, like PyTorch

    block_keys = jax.random.split(kp, d)
    stage_params = []
    for i in range(d):
        if i == 0:
            stage_params.append(init_block_params(block_keys[i], w_in, w_out, w_out // 2, True))
        else:
            stage_params.append(init_block_params(block_keys[i], w_out // 2, w_out, w_out // 2, False))

    # Weight folding is done ONCE here (not inside the per-call forward).
    folded = [fold_block_params(p, proj=(i == 0), w_out=w_out)
              for i, p in enumerate(stage_params)]

    fwd = jax.jit(shuffle_stage_forward, static_argnums=(2,))
    out = jax.block_until_ready(fwd(x, folded, s))
    ref = jax.block_until_ready(ref_stage(x, stage_params, s))

    assert out.shape == (B, w_out, H // s, W // s), out.shape
    # bf16 MXU operands (f32 accumulation) -> loosened tolerance vs. the pure-f32 reference.
    np.testing.assert_allclose(np.asarray(out), np.asarray(ref), rtol=2e-2, atol=2e-2)
    print("KERNEL_OK")
</pallas_src>

<mosaic_0001>
module attributes {stable_mosaic.version = 11 : i64} {
  func.func @_shuffle_block_kernel(%arg0: i32, %arg1: memref<1x16x32xf32, #tpu.memory_space<vmem>>, %arg2: memref<32x48xbf16, #tpu.memory_space<vmem>>, %arg3: memref<3x3x16xf32, #tpu.memory_space<vmem>>, %arg4: memref<1x16xf32, #tpu.memory_space<vmem>>, %arg5: memref<16x32xbf16, #tpu.memory_space<vmem>>, %arg6: memref<1x32xf32, #tpu.memory_space<vmem>>, %arg7: memref<1x16x32xf32, #tpu.memory_space<vmem>>, %arg8: memref<1x6x6x16xf32, #tpu.memory_space<vmem>>, %arg9: memref<1x16x16xf32, #tpu.memory_space<vmem>>) attributes {dimension_semantics = [#tpu.dimension_semantics<parallel>], iteration_bounds = array<i64: 2>, scalar_prefetch = 0 : i64, scratch_operands = 2 : i64, tpu.core_type = #tpu.core_type<tc>, window_params = [{transform_indices = @transform_0, window_bounds = array<i64: 1, 16, 32>}, {pipeline_mode = #tpu.pipeline_mode<synchronous>, transform_indices = @transform_1, window_bounds = array<i64: 32, 48>}, {pipeline_mode = #tpu.pipeline_mode<synchronous>, transform_indices = @transform_2, window_bounds = array<i64: 3, 3, 16>}, {pipeline_mode = #tpu.pipeline_mode<synchronous>, transform_indices = @transform_3, window_bounds = array<i64: 1, 16>}, {pipeline_mode = #tpu.pipeline_mode<synchronous>, transform_indices = @transform_4, window_bounds = array<i64: 16, 32>}, {pipeline_mode = #tpu.pipeline_mode<synchronous>, transform_indices = @transform_5, window_bounds = array<i64: 1, 32>}, {transform_indices = @transform_6, window_bounds = array<i64: 1, 16, 32>}]} {
    %c0 = arith.constant 0 : index
    %c0_0 = arith.constant 0 : index
    %c0_1 = arith.constant 0 : index
    %0 = vector.load %arg1[%c0, %c0_0, %c0_1] : memref<1x16x32xf32, #tpu.memory_space<vmem>>, vector<1x16x32xf32>
    %1 = vector.shape_cast %0 : vector<1x16x32xf32> to vector<16x32xf32>
    %2 = arith.truncf %1 : vector<16x32xf32> to vector<16x32xbf16>
    %c0_2 = arith.constant 0 : index
    %c0_3 = arith.constant 0 : index
    %3 = vector.load %arg2[%c0_2, %c0_3] : memref<32x48xbf16, #tpu.memory_space<vmem>>, vector<32x48xbf16>
    %cst = arith.constant dense<0.000000e+00> : vector<16x48xf32>
    %4 = tpu.matmul %2, %3, %cst {dimension_numbers = #tpu.dot_dimension_numbers<[1], [0], [0], [1], [0, 0, 1, 1], [], []>} : vector<16x32xbf16>, vector<32x48xbf16>, vector<16x48xf32> -> vector<16x48xf32>
    %5 = vector.extract_strided_slice %4 {offsets = [0, 0], sizes = [16, 16], strides = [1, 1]} : vector<16x48xf32> to vector<16x16xf32>
    %cst_4 = arith.constant 0.000000e+00 : f32
    %6 = vector.broadcast %cst_4 : f32 to vector<16x16xf32>
    %7 = arith.maximumf %5, %6 : vector<16x16xf32>
    %8 = vector.extract_strided_slice %4 {offsets = [0, 16], sizes = [16, 32], strides = [1, 1]} : vector<16x48xf32> to vector<16x32xf32>
    %9 = vector.shape_cast %7 : vector<16x16xf32> to vector<1x16x16xf32>
    %c0_5 = arith.constant 0 : index
    %c0_6 = arith.constant 0 : index
    %c0_7 = arith.constant 0 : index
    %10 = vector.load %arg9[%c0_5, %c0_6, %c0_7] : memref<1x16x16xf32, #tpu.memory_space<vmem>>, vector<1x16x16xf32>
    tpu.vector_store %arg9[%c0_5, %c0_6, %c0_7], %9 {strides = array<i32>} : memref<1x16x16xf32, #tpu.memory_space<vmem>>, vector<1x16x16xf32>,
    %cst_8 = arith.constant 0.000000e+00 : f32
    %11 = vector.broadcast %cst_8 : f32 to vector<1x6x6x16xf32>
    %c0_9 = arith.constant 0 : index
    %c0_10 = arith.constant 0 : index
    %c0_11 = arith.constant 0 : index
    %c0_12 = arith.constant 0 : index
    %12 = vector.load %arg8[%c0_9, %c0_10, %c0_11, %c0_12] : memref<1x6x6x16xf32, #tpu.memory_space<vmem>>, vector<1x6x6x16xf32>
    tpu.vector_store %arg8[%c0_9, %c0_10, %c0_11, %c0_12], %11 {strides = array<i32>} : memref<1x6x6x16xf32, #tpu.memory_space<vmem>>, vector<1x6x6x16xf32>,
    %c0_13 = arith.constant 0 : index
    %c0_14 = arith.constant 0 : index
    %c0_15 = arith.constant 0 : index
    %13 = vector.load %arg9[%c0_13, %c0_14, %c0_15] : memref<1x16x16xf32, #tpu.memory_space<vmem>>, vector<1x4x16xf32>
    %14 = vector.shape_cast %13 : vector<1x4x16xf32> to vector<4x16xf32>
    %c0_16 = arith.constant 0 : index
    %c1 = arith.constant 1 : index
    %c1_17 = arith.constant 1 : index
    %c0_18 = arith.constant 0 : index
    %15 = vector.load %arg8[%c0_16, %c1, %c1_17, %c0_18] : memref<1x6x6x16xf32, #tpu.memory_space<vmem>>, vector<1x1x4x16xf32>
    %16 = vector.shape_cast %15 : vector<1x1x4x16xf32> to vector<4x16xf32>
    %17 = vector.shape_cast %14 : vector<4x16xf32> to vector<1x1x4x16xf32>
    tpu.vector_store %arg8[%c0_16, %c1, %c1_17, %c0_18], %17 {strides = array<i32>} : memref<1x6x6x16xf32, #tpu.memory_space<vmem>>, vector<1x1x4x16xf32>,
    %c0_19 = arith.constant 0 : index
    %c4 = arith.constant 4 : index
    %c0_20 = arith.constant 0 : index
    %18 = vector.load %arg9[%c0_19, %c4, %c0_20] : memref<1x16x16xf32, #tpu.memory_space<vmem>>, vector<1x4x16xf32>
    %19 = vector.shape_cast %18 : vector<1x4x16xf32> to vector<4x16xf32>
    %c0_21 = arith.constant 0 : index
    %c2 = arith.constant 2 : index
    %c1_22 = arith.constant 1 : index
    %c0_23 = arith.constant 0 : index
    %20 = vector.load %arg8[%c0_21, %c2, %c1_22, %c0_23] : memref<1x6x6x16xf32, #tpu.memory_space<vmem>>, vector<1x1x4x16xf32>
    %21 = vector.shape_cast %20 : vector<1x1x4x16xf32> to vector<4x16xf32>
    %22 = vector.shape_cast %19 : vector<4x16xf32> to vector<1x1x4x16xf32>
    tpu.vector_store %arg8[%c0_21, %c2, %c1_22, %c0_23], %22 {strides = array<i32>} : memref<1x6x6x16xf32, #tpu.memory_space<vmem>>, vector<1x1x4x16xf32>,
    %c0_24 = arith.constant 0 : index
    %c8 = arith.constant 8 : index
    %c0_25 = arith.constant 0 : index
    %23 = vector.load %arg9[%c0_24, %c8, %c0_25] : memref<1x16x16xf32, #tpu.memory_space<vmem>>, vector<1x4x16xf32>
    %24 = vector.shape_cast %23 : vector<1x4x16xf32> to vector<4x16xf32>
    %c0_26 = arith.constant 0 : index
    %c3 = arith.constant 3 : index
    %c1_27 = arith.constant 1 : index
    %c0_28 = arith.constant 0 : index
    %25 = vector.load %arg8[%c0_26, %c3, %c1_27, %c0_28] : memref<1x6x6x16xf32, #tpu.memory_space<vmem>>, vector<1x1x4x16xf32>
    %26 = vector.shape_cast %25 : vector<1x1x4x16xf32> to vector<4x16xf32>
    %27 = vector.shape_cast %24 : vector<4x16xf32> to vector<1x1x4x16xf32>
    tpu.vector_store %arg8[%c0_26, %c3, %c1_27, %c0_28], %27 {strides = array<i32>} : memref<1x6x6x16xf32, #tpu.memory_space<vmem>>, vector<1x1x4x16xf32>,
    %c0_29 = arith.constant 0 : index
    %c12 = arith.constant 12 : index
    %c0_30 = arith.constant 0 : index
    %28 = vector.load %arg9[%c0_29, %c12, %c0_30] : memref<1x16x16xf32, #tpu.memory_space<vmem>>, vector<1x4x16xf32>
    %29 = vector.shape_cast %28 : vector<1x4x16xf32> to vector<4x16xf32>
    %c0_31 = arith.constant 0 : index
    %c4_32 = arith.constant 4 : index
    %c1_33 = arith.constant 1 : index
    %c0_34 = arith.constant 0 : index
    %30 = vector.load %arg8[%c0_31, %c4_32, %c1_33, %c0_34] : memref<1x6x6x16xf32, #tpu.memory_space<vmem>>, vector<1x1x4x16xf32>
    %31 = vector.shape_cast %30 : vector<1x1x4x16xf32> to vector<4x16xf32>
    %32 = vector.shape_cast %29 : vector<4x16xf32> to vector<1x1x4x16xf32>
    tpu.vector_store %arg8[%c0_31, %c4_32, %c1_33, %c0_34], %32 {strides = array<i32>} : memref<1x6x6x16xf32, #tpu.memory_space<vmem>>, vector<1x1x4x16xf32>,
    %cst_35 = arith.constant 0.000000e+00 : f32
    %33 = vector.broadcast %cst_35 : f32 to vector<1x4x4x16xf32>
    %c0_36 = arith.constant 0 : index
    %c0_37 = arith.constant 0 : index
    %c0_38 = arith.constant 0 : index
    %c0_39 = arith.constant 0 : index
    %34 = vector.load %arg8[%c0_36, %c0_37, %c0_38, %c0_39] : memref<1x6x6x16xf32, #tpu.memory_space<vmem>>, vector<1x4x4x16xf32>
    %c0_40 = arith.constant 0 : index
    %c0_41 = arith.constant 0 : index
    %c0_42 = arith.constant 0 : index
    %35 = vector.load %arg3[%c0_40, %c0_41, %c0_42] : memref<3x3x16xf32, #tpu.memory_space<vmem>>, vector<1x1x16xf32>
    %36 = vector.shape_cast %35 : vector<1x1x16xf32> to vector<16xf32>
    %37 = vector.shape_cast %36 : vector<16xf32> to vector<1x1x1x16xf32>
    %38 = vector.broadcast %37 : vector<1x1x1x16xf32> to vector<1x4x4x16xf32>
    %39 = arith.mulf %34, %38 : vector<1x4x4x16xf32>
    %40 = arith.addf %33, %39 : vector<1x4x4x16xf32>
    %c0_43 = arith.constant 0 : index
    %c0_44 = arith.constant 0 : index
    %c1_45 = arith.constant 1 : index
    %c0_46 = arith.constant 0 : index
    %41 = vector.load %arg8[%c0_43, %c0_44, %c1_45, %c0_46] : memref<1x6x6x16xf32, #tpu.memory_space<vmem>>, vector<1x4x4x16xf32>
    %c0_47 = arith.constant 0 : index
    %c1_48 = arith.constant 1 : index
    %c0_49 = arith.constant 0 : index
    %42 = vector.load %arg3[%c0_47, %c1_48, %c0_49] : memref<3x3x16xf32, #tpu.memory_space<vmem>>, vector<1x1x16xf32>
    %43 = vector.shape_cast %42 : vector<1x1x16xf32> to vector<16xf32>
    %44 = vector.shape_cast %43 : vector<16xf32> to vector<1x1x1x16xf32>
    %45 = vector.broadcast %44 : vector<1x1x1x16xf32> to vector<1x4x4x16xf32>
    %46 = arith.mulf %41, %45 : vector<1x4x4x16xf32>
    %47 = arith.addf %40, %46 : vector<1x4x4x16xf32>
    %c0_50 = arith.constant 0 : index
    %c0_51 = arith.constant 0 : index
    %c2_52 = arith.constant 2 : index
    %c0_53 = arith.constant 0 : index
    %48 = vector.load %arg8[%c0_50, %c0_51, %c2_52, %c0_53] : memref<1x6x6x16xf32, #tpu.memory_space<vmem>>, vector<1x4x4x16xf32>
    %c0_54 = arith.constant 0 : index
    %c2_55 = arith.constant 2 : index
    %c0_56 = arith.constant 0 : index
    %49 = vector.load %arg3[%c0_54, %c2_55, %c0_56] : memref<3x3x16xf32, #tpu.memory_space<vmem>>, vector<1x1x16xf32>
    %50 = vector.shape_cast %49 : vector<1x1x16xf32> to vector<16xf32>
    %51 = vector.shape_cast %50 : vector<16xf32> to vector<1x1x1x16xf32>
    %52 = vector.broadcast %51 : vector<1x1x1x16xf32> to vector<1x4x4x16xf32>
    %53 = arith.mulf %48, %52 : vector<1x4x4x16xf32>
    %54 = arith.addf %47, %53 : vector<1x4x4x16xf32>
    %c0_57 = arith.constant 0 : index
    %c1_58 = arith.constant 1 : index
    %c0_59 = arith.constant 0 : index
    %c0_60 = arith.constant 0 : index
    %55 = vector.load %arg8[%c0_57, %c1_58, %c0_59, %c0_60] : memref<1x6x6x16xf32, #tpu.memory_space<vmem>>, vector<1x4x4x16xf32>
    %c1_61 = arith.constant 1 : index
    %c0_62 = arith.constant 0 : index
    %c0_63 = arith.constant 0 : index
    %56 = vector.load %arg3[%c1_61, %c0_62, %c0_63] : memref<3x3x16xf32, #tpu.memory_space<vmem>>, vector<1x1x16xf32>
    %57 = vector.shape_cast %56 : vector<1x1x16xf32> to vector<16xf32>
    %58 = vector.shape_cast %57 : vector<16xf32> to vector<1x1x1x16xf32>
    %59 = vector.broadcast %58 : vector<1x1x1x16xf32> to vector<1x4x4x16xf32>
    %60 = arith.mulf %55, %59 : vector<1x4x4x16xf32>
    %61 = arith.addf %54, %60 : vector<1x4x4x16xf32>
    %c0_64 = arith.constant 0 : index
    %c1_65 = arith.constant 1 : index
    %c1_66 = arith.constant 1 : index
    %c0_67 = arith.constant 0 : index
    %62 = vector.load %arg8[%c0_64, %c1_65, %c1_66, %c0_67] : memref<1x6x6x16xf32, #tpu.memory_space<vmem>>, vector<1x4x4x16xf32>
    %c1_68 = arith.constant 1 : index
    %c1_69 = arith.constant 1 : index
    %c0_70 = arith.constant 0 : index
    %63 = vector.load %arg3[%c1_68, %c1_69, %c0_70] : memref<3x3x16xf32, #tpu.memory_space<vmem>>, vector<1x1x16xf32>
    %64 = vector.shape_cast %63 : vector<1x1x16xf32> to vector<16xf32>
    %65 = vector.shape_cast %64 : vector<16xf32> to vector<1x1x1x16xf32>
    %66 = vector.broadcast %65 : vector<1x1x1x16xf32> to vector<1x4x4x16xf32>
    %67 = arith.mulf %62, %66 : vector<1x4x4x16xf32>
    %68 = arith.addf %61, %67 : vector<1x4x4x16xf32>
    %c0_71 = arith.constant 0 : index
    %c1_72 = arith.constant 1 : index
    %c2_73 = arith.constant 2 : index
    %c0_74 = arith.constant 0 : index
    %69 = vector.load %arg8[%c0_71, %c1_72, %c2_73, %c0_74] : memref<1x6x6x16xf32, #tpu.memory_space<vmem>>, vector<1x4x4x16xf32>
    %c1_75 = arith.constant 1 : index
    %c2_76 = arith.constant 2 : index
    %c0_77 = arith.constant 0 : index
    %70 = vector.load %arg3[%c1_75, %c2_76, %c0_77] : memref<3x3x16xf32, #tpu.memory_space<vmem>>, vector<1x1x16xf32>
    %71 = vector.shape_cast %70 : vector<1x1x16xf32> to vector<16xf32>
    %72 = vector.shape_cast %71 : vector<16xf32> to vector<1x1x1x16xf32>
    %73 = vector.broadcast %72 : vector<1x1x1x16xf32> to vector<1x4x4x16xf32>
    %74 = arith.mulf %69, %73 : vector<1x4x4x16xf32>
    %75 = arith.addf %68, %74 : vector<1x4x4x16xf32>
    %c0_78 = arith.constant 0 : index
    %c2_79 = arith.constant 2 : index
    %c0_80 = arith.constant 0 : index
    %c0_81 = arith.constant 0 : index
    %76 = vector.load %arg8[%c0_78, %c2_79, %c0_80, %c0_81] : memref<1x6x6x16xf32, #tpu.memory_space<vmem>>, vector<1x4x4x16xf32>
    %c2_82 = arith.constant 2 : index
    %c0_83 = arith.constant 0 : index
    %c0_84 = arith.constant 0 : index
    %77 = vector.load %arg3[%c2_82, %c0_83, %c0_84] : memref<3x3x16xf32, #tpu.memory_space<vmem>>, vector<1x1x16xf32>
    %78 = vector.shape_cast %77 : vector<1x1x16xf32> to vector<16xf32>
    %79 = vector.shape_cast %78 : vector<16xf32> to vector<1x1x1x16xf32>
    %80 = vector.broadcast %79 : vector<1x1x1x16xf32> to vector<1x4x4x16xf32>
    %81 = arith.mulf %76, %80 : vector<1x4x4x16xf32>
    %82 = arith.addf %75, %81 : vector<1x4x4x16xf32>
    %c0_85 = arith.constant 0 : index
    %c2_86 = arith.constant 2 : index
    %c1_87 = arith.constant 1 : index
    %c0_88 = arith.constant 0 : index
    %83 = vector.load %arg8[%c0_85, %c2_86, %c1_87, %c0_88] : memref<1x6x6x16xf32, #tpu.memory_space<vmem>>, vector<1x4x4x16xf32>
    %c2_89 = arith.constant 2 : index
    %c1_90 = arith.constant 1 : index
    %c0_91 = arith.constant 0 : index
    %84 = vector.load %arg3[%c2_89, %c1_90, %c0_91] : memref<3x3x16xf32, #tpu.memory_space<vmem>>, vector<1x1x16xf32>
    %85 = vector.shape_cast %84 : vector<1x1x16xf32> to vector<16xf32>
    %86 = vector.shape_cast %85 : vector<16xf32> to vector<1x1x1x16xf32>
    %87 = vector.broadcast %86 : vector<1x1x1x16xf32> to vector<1x4x4x16xf32>
    %88 = arith.mulf %83, %87 : vector<1x4x4x16xf32>
    %89 = arith.addf %82, %88 : vector<1x4x4x16xf32>
    %c0_92 = arith.constant 0 : index
    %c2_93 = arith.constant 2 : index
    %c2_94 = arith.constant 2 : index
    %c0_95 = arith.constant 0 : index
    %90 = vector.load %arg8[%c0_92, %c2_93, %c2_94, %c0_95] : memref<1x6x6x16xf32, #tpu.memory_space<vmem>>, vector<1x4x4x16xf32>
    %c2_96 = arith.constant 2 : index
    %c2_97 = arith.constant 2 : index
    %c0_98 = arith.constant 0 : index
    %91 = vector.load %arg3[%c2_96, %c2_97, %c0_98] : memref<3x3x16xf32, #tpu.memory_space<vmem>>, vector<1x1x16xf32>
    %92 = vector.shape_cast %91 : vector<1x1x16xf32> to vector<16xf32>
    %93 = vector.shape_cast %92 : vector<16xf32> to vector<1x1x1x16xf32>
    %94 = vector.broadcast %93 : vector<1x1x1x16xf32> to vector<1x4x4x16xf32>
    %95 = arith.mulf %90, %94 : vector<1x4x4x16xf32>
    %96 = arith.addf %89, %95 : vector<1x4x4x16xf32>
    %c0_99 = arith.constant 0 : index
    %c0_100 = arith.constant 0 : index
    %97 = vector.load %arg4[%c0_99, %c0_100] : memref<1x16xf32, #tpu.memory_space<vmem>>, vector<1x16xf32>
    %98 = vector.shape_cast %97 : vector<1x16xf32> to vector<16xf32>
    %99 = vector.shape_cast %98 : vector<16xf32> to vector<1x1x1x16xf32>
    %100 = vector.broadcast %99 : vector<1x1x1x16xf32> to vector<1x4x4x16xf32>
    %101 = arith.addf %96, %100 : vector<1x4x4x16xf32>
    %102 = vector.extract_strided_slice %101 {offsets = [0, 0, 0, 0], sizes = [1, 1, 4, 16], strides = [1, 1, 1, 1]} : vector<1x4x4x16xf32> to vector<1x1x4x16xf32>
    %103 = vector.shape_cast %102 : vector<1x1x4x16xf32> to vector<4x16xf32>
    %c0_101 = arith.constant 0 : index
    %c0_102 = arith.constant 0 : index
    %c0_103 = arith.constant 0 : index
    %104 = vector.load %arg9[%c0_101, %c0_102, %c0_103] : memref<1x16x16xf32, #tpu.memory_space<vmem>>, vector<1x4x16xf32>
    %105 = vector.shape_cast %104 : vector<1x4x16xf32> to vector<4x16xf32>
    %106 = vector.shape_cast %103 : vector<4x16xf32> to vector<1x4x16xf32>
    tpu.vector_store %arg9[%c0_101, %c0_102, %c0_103], %106 {strides = array<i32>} : memref<1x16x16xf32, #tpu.memory_space<vmem>>, vector<1x4x16xf32>,
    %107 = vector.extract_strided_slice %101 {offsets = [0, 1, 0, 0], sizes = [1, 1, 4, 16], strides = [1, 1, 1, 1]} : vector<1x4x4x16xf32> to vector<1x1x4x16xf32>
    %108 = vector.shape_cast %107 : vector<1x1x4x16xf32> to vector<4x16xf32>
    %c0_104 = arith.constant 0 : index
    %c4_105 = arith.constant 4 : index
    %c0_106 = arith.constant 0 : index
    %109 = vector.load %arg9[%c0_104, %c4_105, %c0_106] : memref<1x16x16xf32, #tpu.memory_space<vmem>>, vector<1x4x16xf32>
    %110 = vector.shape_cast %109 : vector<1x4x16xf32> to vector<4x16xf32>
    %111 = vector.shape_cast %108 : vector<4x16xf32> to vector<1x4x16xf32>
    tpu.vector_store %arg9[%c0_104, %c4_105, %c0_106], %111 {strides = array<i32>} : memref<1x16x16xf32, #tpu.memory_space<vmem>>, vector<1x4x16xf32>,
    %112 = vector.extract_strided_slice %101 {offsets = [0, 2, 0, 0], sizes = [1, 1, 4, 16], strides = [1, 1, 1, 1]} : vector<1x4x4x16xf32> to vector<1x1x4x16xf32>
    %113 = vector.shape_cast %112 : vector<1x1x4x16xf32> to vector<4x16xf32>
    %c0_107 = arith.constant 0 : index
    %c8_108 = arith.constant 8 : index
    %c0_109 = arith.constant 0 : index
    %114 = vector.load %arg9[%c0_107, %c8_108, %c0_109] : memref<1x16x16xf32, #tpu.memory_space<vmem>>, vector<1x4x16xf32>
    %115 = vector.shape_cast %114 : vector<1x4x16xf32> to vector<4x16xf32>
    %116 = vector.shape_cast %113 : vector<4x16xf32> to vector<1x4x16xf32>
    tpu.vector_store %arg9[%c0_107, %c8_108, %c0_109], %116 {strides = array<i32>} : memref<1x16x16xf32, #tpu.memory_space<vmem>>, vector<1x4x16xf32>,
    %117 = vector.extract_strided_slice %101 {offsets = [0, 3, 0, 0], sizes = [1, 1, 4, 16], strides = [1, 1, 1, 1]} : vector<1x4x4x16xf32> to vector<1x1x4x16xf32>
    %118 = vector.shape_cast %117 : vector<1x1x4x16xf32> to vector<4x16xf32>
    %c0_110 = arith.constant 0 : index
    %c12_111 = arith.constant 12 : index
    %c0_112 = arith.constant 0 : index
    %119 = vector.load %arg9[%c0_110, %c12_111, %c0_112] : memref<1x16x16xf32, #tpu.memory_space<vmem>>, vector<1x4x16xf32>
    %120 = vector.shape_cast %119 : vector<1x4x16xf32> to vector<4x16xf32>
    %121 = vector.shape_cast %118 : vector<4x16xf32> to vector<1x4x16xf32>
    tpu.vector_store %arg9[%c0_110, %c12_111, %c0_112], %121 {strides = array<i32>} : memref<1x16x16xf32, #tpu.memory_space<vmem>>, vector<1x4x16xf32>,
    %c0_113 = arith.constant 0 : index
    %c0_114 = arith.constant 0 : index
    %c0_115 = arith.constant 0 : index
    %122 = vector.load %arg9[%c0_113, %c0_114, %c0_115] : memref<1x16x16xf32, #tpu.memory_space<vmem>>, vector<1x16x16xf32>
    %123 = vector.shape_cast %122 : vector<1x16x16xf32> to vector<16x16xf32>
    %124 = arith.truncf %123 : vector<16x16xf32> to vector<16x16xbf16>
    %c0_116 = arith.constant 0 : index
    %c0_117 = arith.constant 0 : index
    %125 = vector.load %arg5[%c0_116, %c0_117] : memref<16x32xbf16, #tpu.memory_space<vmem>>, vector<16x32xbf16>
    %cst_118 = arith.constant dense<0.000000e+00> : vector<16x32xf32>
    %126 = tpu.matmul %124, %125, %cst_118 {dimension_numbers = #tpu.dot_dimension_numbers<[1], [0], [0], [1], [0, 0, 1, 1], [], []>} : vector<16x16xbf16>, vector<16x32xbf16>, vector<16x32xf32> -> vector<16x32xf32>
    %c0_119 = arith.constant 0 : index
    %c0_120 = arith.constant 0 : index
    %127 = vector.load %arg6[%c0_119, %c0_120] : memref<1x32xf32, #tpu.memory_space<vmem>>, vector<1x32xf32>
    %128 = vector.shape_cast %127 : vector<1x32xf32> to vector<32xf32>
    %129 = vector.shape_cast %128 : vector<32xf32> to vector<1x32xf32>
    %130 = vector.broadcast %129 : vector<1x32xf32> to vector<16x32xf32>
    %131 = arith.addf %126, %130 : vector<16x32xf32>
    %cst_121 = arith.constant 0.000000e+00 : f32
    %132 = vector.broadcast %cst_121 : f32 to vector<16x32xf32>
    %133 = arith.maximumf %131, %132 : vector<16x32xf32>
    %134 = arith.addf %8, %133 : vector<16x32xf32>
    %135 = vector.shape_cast %134 : vector<16x32xf32> to vector<1x16x32xf32>
    %c0_122 = arith.constant 0 : index
    %c0_123 = arith.constant 0 : index
    %c0_124 = arith.constant 0 : index
    %136 = vector.load %arg7[%c0_122, %c0_123, %c0_124] : memref<1x16x32xf32, #tpu.memory_space<vmem>>, vector<1x16x32xf32>
    tpu.vector_store %arg7[%c0_122, %c0_123, %c0_124], %135 {strides = array<i32>} : memref<1x16x32xf32, #tpu.memory_space<vmem>>, vector<1x16x32xf32>,
    return
  }
  func.func @transform_0(%arg0: i32) -> (i32, i32, i32) {
    %c0_i32 = arith.constant 0 : i32
    %c0_i32_0 = arith.constant 0 : i32
    %c0_i32_1 = arith.constant 0 : i32
    return %arg0, %c0_i32, %c0_i32_0 : i32, i32, i32
  }
  func.func @transform_1(%arg0: i32) -> (i32, i32) {
    %c0_i32 = arith.constant 0 : i32
    %c0_i32_0 = arith.constant 0 : i32
    %c0_i32_1 = arith.constant 0 : i32
    return %c0_i32, %c0_i32_0 : i32, i32
  }
  func.func @transform_2(%arg0: i32) -> (i32, i32, i32) {
    %c0_i32 = arith.constant 0 : i32
    %c0_i32_0 = arith.constant 0 : i32
    %c0_i32_1 = arith.constant 0 : i32
    %c0_i32_2 = arith.constant 0 : i32
    return %c0_i32, %c0_i32_0, %c0_i32_1 : i32, i32, i32
  }
  func.func @transform_3(%arg0: i32) -> (i32, i32) {
    %c0_i32 = arith.constant 0 : i32
    %c0_i32_0 = arith.constant 0 : i32
    %c0_i32_1 = arith.constant 0 : i32
    return %c0_i32, %c0_i32_0 : i32, i32
  }
  func.func @transform_4(%arg0: i32) -> (i32, i32) {
    %c0_i32 = arith.constant 0 : i32
    %c0_i32_0 = arith.constant 0 : i32
    %c0_i32_1 = arith.constant 0 : i32
    return %c0_i32, %c0_i32_0 : i32, i32
  }
  func.func @transform_5(%arg0: i32) -> (i32, i32) {
    %c0_i32 = arith.constant 0 : i32
    %c0_i32_0 = arith.constant 0 : i32
    %c0_i32_1 = arith.constant 0 : i32
    return %c0_i32, %c0_i32_0 : i32, i32
  }
  func.func @transform_6(%arg0: i32) -> (i32, i32, i32) {
    %c0_i32 = arith.constant 0 : i32
    %c0_i32_0 = arith.constant 0 : i32
    %c0_i32_1 = arith.constant 0 : i32
    return %arg0, %c0_i32, %c0_i32_0 : i32, i32, i32
  }
}

module attributes {stable_mosaic.version = 11 : i64} {
  func.func @_proj_block_kernel(%arg0: i32, %arg1: memref<1x2x2x5x8x16xf32, #tpu.memory_space<vmem>>, %arg2: memref<16x16xbf16, #tpu.memory_space<vmem>>, %arg3: memref<3x3x16xf32, #tpu.memory_space<vmem>>, %arg4: memref<1x16xf32, #tpu.memory_space<vmem>>, %arg5: memref<3x3x16xf32, #tpu.memory_space<vmem>>, %arg6: memref<1x16xf32, #tpu.memory_space<vmem>>, %arg7: memref<32x32xbf16, #tpu.memory_space<vmem>>, %arg8: memref<1x32xf32, #tpu.memory_space<vmem>>, %arg9: memref<1x16x32xf32, #tpu.memory_space<vmem>>, %arg10: memref<1x2x2x5x8x16xf32, #tpu.memory_space<vmem>>, %arg11: memref<1x16x32xf32, #tpu.memory_space<vmem>>) attributes {dimension_semantics = [#tpu.dimension_semantics<parallel>], iteration_bounds = array<i64: 2>, scalar_prefetch = 0 : i64, scratch_operands = 2 : i64, tpu.core_type = #tpu.core_type<tc>, window_params = [{transform_indices = @transform_0, window_bounds = array<i64: 1, 2, 2, 5, 8, 16>}, {pipeline_mode = #tpu.pipeline_mode<synchronous>, transform_indices = @transform_1, window_bounds = array<i64: 16, 16>}, {pipeline_mode = #tpu.pipeline_mode<synchronous>, transform_indices = @transform_2, window_bounds = array<i64: 3, 3, 16>}, {pipeline_mode = #tpu.pipeline_mode<synchronous>, transform_indices = @transform_3, window_bounds = array<i64: 1, 16>}, {pipeline_mode = #tpu.pipeline_mode<synchronous>, transform_indices = @transform_4, window_bounds = array<i64: 3, 3, 16>}, {pipeline_mode = #tpu.pipeline_mode<synchronous>, transform_indices = @transform_5, window_bounds = array<i64: 1, 16>}, {pipeline_mode = #tpu.pipeline_mode<synchronous>, transform_indices = @transform_6, window_bounds = array<i64: 32, 32>}, {pipeline_mode = #tpu.pipeline_mode<synchronous>, transform_indices = @transform_7, window_bounds = array<i64: 1, 32>}, {transform_indices = @transform_8, window_bounds = array<i64: 1, 16, 32>}]} {
    %c0 = arith.constant 0 : index
    %c0_0 = arith.constant 0 : index
    %c0_1 = arith.constant 0 : index
    %c0_2 = arith.constant 0 : index
    %c0_3 = arith.constant 0 : index
    %c0_4 = arith.constant 0 : index
    %0 = vector.load %arg1[%c0, %c0_0, %c0_1, %c0_2, %c0_3, %c0_4] : memref<1x2x2x5x8x16xf32, #tpu.memory_space<vmem>>, vector<1x2x2x5x8x16xf32>
    %1 = vector.shape_cast %0 : vector<1x2x2x5x8x16xf32> to vector<160x16xf32>
    %2 = arith.truncf %1 : vector<160x16xf32> to vector<160x16xbf16>
    %c0_5 = arith.constant 0 : index
    %c0_6 = arith.constant 0 : index
    %3 = vector.load %arg2[%c0_5, %c0_6] : memref<16x16xbf16, #tpu.memory_space<vmem>>, vector<16x16xbf16>
    %cst = arith.constant dense<0.000000e+00> : vector<160x16xf32>
    %4 = tpu.matmul %2, %3, %cst {dimension_numbers = #tpu.dot_dimension_numbers<[1], [0], [0], [1], [0, 0, 1, 1], [], []>} : vector<160x16xbf16>, vector<16x16xbf16>, vector<160x16xf32> -> vector<160x16xf32>
    %cst_7 = arith.constant 0.000000e+00 : f32
    %5 = vector.broadcast %cst_7 : f32 to vector<160x16xf32>
    %6 = arith.maximumf %4, %5 : vector<160x16xf32>
    %7 = vector.shape_cast %6 : vector<160x16xf32> to vector<1x2x2x5x8x16xf32>
    %c0_8 = arith.constant 0 : index
    %c0_9 = arith.constant 0 : index
    %c0_10 = arith.constant 0 : index
    %c0_11 = arith.constant 0 : index
    %c0_12 = arith.constant 0 : index
    %c0_13 = arith.constant 0 : index
    %8 = vector.load %arg10[%c0_8, %c0_9, %c0_10, %c0_11, %c0_12, %c0_13] : memref<1x2x2x5x8x16xf32, #tpu.memory_space<vmem>>, vector<1x2x2x5x8x16xf32>
    tpu.vector_store %arg10[%c0_8, %c0_9, %c0_10, %c0_11, %c0_12, %c0_13], %7 {strides = array<i32>} : memref<1x2x2x5x8x16xf32, #tpu.memory_space<vmem>>, vector<1x2x2x5x8x16xf32>,
    %cst_14 = arith.constant 0.000000e+00 : f32
    %9 = vector.broadcast %cst_14 : f32 to vector<1x4x4x16xf32>
    %cst_15 = arith.constant 0.000000e+00 : f32
    %10 = vector.broadcast %cst_15 : f32 to vector<1x4x4x16xf32>
    %c0_16 = arith.constant 0 : index
    %c0_17 = arith.constant 0 : index
    %c0_18 = arith.constant 0 : index
    %c0_19 = arith.constant 0 : index
    %c0_20 = arith.constant 0 : index
    %c0_21 = arith.constant 0 : index
    %11 = vector.load %arg10[%c0_16, %c0_17, %c0_18, %c0_19, %c0_20, %c0_21] : memref<1x2x2x5x8x16xf32, #tpu.memory_space<vmem>>, vector<1x1x1x4x4x16xf32>
    %12 = vector.shape_cast %11 : vector<1x1x1x4x4x16xf32> to vector<1x4x4x16xf32>
    %c0_22 = arith.constant 0 : index
    %c0_23 = arith.constant 0 : index
    %c0_24 = arith.constant 0 : index
    %13 = vector.load %arg3[%c0_22, %c0_23, %c0_24] : memref<3x3x16xf32, #tpu.memory_space<vmem>>, vector<1x1x16xf32>
    %14 = vector.shape_cast %13 : vector<1x1x16xf32> to vector<16xf32>
    %15 = vector.shape_cast %14 : vector<16xf32> to vector<1x1x1x16xf32>
    %16 = vector.broadcast %15 : vector<1x1x1x16xf32> to vector<1x4x4x16xf32>
    %17 = arith.mulf %12, %16 : vector<1x4x4x16xf32>
    %18 = arith.addf %9, %17 : vector<1x4x4x16xf32>
    %c0_25 = arith.constant 0 : index
    %c0_26 = arith.constant 0 : index
    %c0_27 = arith.constant 0 : index
    %c0_28 = arith.constant 0 : index
    %c0_29 = arith.constant 0 : index
    %c0_30 = arith.constant 0 : index
    %19 = vector.load %arg1[%c0_25, %c0_26, %c0_27, %c0_28, %c0_29, %c0_30] : memref<1x2x2x5x8x16xf32, #tpu.memory_space<vmem>>, vector<1x1x1x4x4x16xf32>
    %20 = vector.shape_cast %19 : vector<1x1x1x4x4x16xf32> to vector<1x4x4x16xf32>
    %c0_31 = arith.constant 0 : index
    %c0_32 = arith.constant 0 : index
    %c0_33 = arith.constant 0 : index
    %21 = vector.load %arg5[%c0_31, %c0_32, %c0_33] : memref<3x3x16xf32, #tpu.memory_space<vmem>>, vector<1x1x16xf32>
    %22 = vector.shape_cast %21 : vector<1x1x16xf32> to vector<16xf32>
    %23 = vector.shape_cast %22 : vector<16xf32> to vector<1x1x1x16xf32>
    %24 = vector.broadcast %23 : vector<1x1x1x16xf32> to vector<1x4x4x16xf32>
    %25 = arith.mulf %20, %24 : vector<1x4x4x16xf32>
    %26 = arith.addf %10, %25 : vector<1x4x4x16xf32>
    %c0_34 = arith.constant 0 : index
    %c0_35 = arith.constant 0 : index
    %c1 = arith.constant 1 : index
    %c0_36 = arith.constant 0 : index
    %c0_37 = arith.constant 0 : index
    %c0_38 = arith.constant 0 : index
    %27 = vector.load %arg10[%c0_34, %c0_35, %c1, %c0_36, %c0_37, %c0_38] : memref<1x2x2x5x8x16xf32, #tpu.memory_space<vmem>>, vector<1x1x1x4x4x16xf32>
    %28 = vector.shape_cast %27 : vector<1x1x1x4x4x16xf32> to vector<1x4x4x16xf32>
    %c0_39 = arith.constant 0 : index
    %c1_40 = arith.constant 1 : index
    %c0_41 = arith.constant 0 : index
    %29 = vector.load %arg3[%c0_39, %c1_40, %c0_41] : memref<3x3x16xf32, #tpu.memory_space<vmem>>, vector<1x1x16xf32>
    %30 = vector.shape_cast %29 : vector<1x1x16xf32> to vector<16xf32>
    %31 = vector.shape_cast %30 : vector<16xf32> to vector<1x1x1x16xf32>
    %32 = vector.broadcast %31 : vector<1x1x1x16xf32> to vector<1x4x4x16xf32>
    %33 = arith.mulf %28, %32 : vector<1x4x4x16xf32>
    %34 = arith.addf %18, %33 : vector<1x4x4x16xf32>
    %c0_42 = arith.constant 0 : index
    %c0_43 = arith.constant 0 : index
    %c1_44 = arith.constant 1 : index
    %c0_45 = arith.constant 0 : index
    %c0_46 = arith.constant 0 : index
    %c0_47 = arith.constant 0 : index
    %35 = vector.load %arg1[%c0_42, %c0_43, %c1_44, %c0_45, %c0_46, %c0_47] : memref<1x2x2x5x8x16xf32, #tpu.memory_space<vmem>>, vector<1x1x1x4x4x16xf32>
    %36 = vector.shape_cast %35 : vector<1x1x1x4x4x16xf32> to vector<1x4x4x16xf32>
    %c0_48 = arith.constant 0 : index
    %c1_49 = arith.constant 1 : index
    %c0_50 = arith.constant 0 : index
    %37 = vector.load %arg5[%c0_48, %c1_49, %c0_50] : memref<3x3x16xf32, #tpu.memory_space<vmem>>, vector<1x1x16xf32>
    %38 = vector.shape_cast %37 : vector<1x1x16xf32> to vector<16xf32>
    %39 = vector.shape_cast %38 : vector<16xf32> to vector<1x1x1x16xf32>
    %40 = vector.broadcast %39 : vector<1x1x1x16xf32> to vector<1x4x4x16xf32>
    %41 = arith.mulf %36, %40 : vector<1x4x4x16xf32>
    %42 = arith.addf %26, %41 : vector<1x4x4x16xf32>
    %c0_51 = arith.constant 0 : index
    %c0_52 = arith.constant 0 : index
    %c0_53 = arith.constant 0 : index
    %c0_54 = arith.constant 0 : index
    %c1_55 = arith.constant 1 : index
    %c0_56 = arith.constant 0 : index
    %43 = vector.load %arg10[%c0_51, %c0_52, %c0_53, %c0_54, %c1_55, %c0_56] : memref<1x2x2x5x8x16xf32, #tpu.memory_space<vmem>>, vector<1x1x1x4x4x16xf32>
    %44 = vector.shape_cast %43 : vector<1x1x1x4x4x16xf32> to vector<1x4x4x16xf32>
    %c0_57 = arith.constant 0 : index
    %c2 = arith.constant 2 : index
    %c0_58 = arith.constant 0 : index
    %45 = vector.load %arg3[%c0_57, %c2, %c0_58] : memref<3x3x16xf32, #tpu.memory_space<vmem>>, vector<1x1x16xf32>
    %46 = vector.shape_cast %45 : vector<1x1x16xf32> to vector<16xf32>
    %47 = vector.shape_cast %46 : vector<16xf32> to vector<1x1x1x16xf32>
    %48 = vector.broadcast %47 : vector<1x1x1x16xf32> to vector<1x4x4x16xf32>
    %49 = arith.mulf %44, %48 : vector<1x4x4x16xf32>
    %50 = arith.addf %34, %49 : vector<1x4x4x16xf32>
    %c0_59 = arith.constant 0 : index
    %c0_60 = arith.constant 0 : index
    %c0_61 = arith.constant 0 : index
    %c0_62 = arith.constant 0 : index
    %c1_63 = arith.constant 1 : index
    %c0_64 = arith.constant 0 : index
    %51 = vector.load %arg1[%c0_59, %c0_60, %c0_61, %c0_62, %c1_63, %c0_64] : memref<1x2x2x5x8x16xf32, #tpu.memory_space<vmem>>, vector<1x1x1x4x4x16xf32>
    %52 = vector.shape_cast %51 : vector<1x1x1x4x4x16xf32> to vector<1x4x4x16xf32>
    %c0_65 = arith.constant 0 : index
    %c2_66 = arith.constant 2 : index
    %c0_67 = arith.constant 0 : index
    %53 = vector.load %arg5[%c0_65, %c2_66, %c0_67] : memref<3x3x16xf32, #tpu.memory_space<vmem>>, vector<1x1x16xf32>
    %54 = vector.shape_cast %53 : vector<1x1x16xf32> to vector<16xf32>
    %55 = vector.shape_cast %54 : vector<16xf32> to vector<1x1x1x16xf32>
    %56 = vector.broadcast %55 : vector<1x1x1x16xf32> to vector<1x4x4x16xf32>
    %57 = arith.mulf %52, %56 : vector<1x4x4x16xf32>
    %58 = arith.addf %42, %57 : vector<1x4x4x16xf32>
    %c0_68 = arith.constant 0 : index
    %c1_69 = arith.constant 1 : index
    %c0_70 = arith.constant 0 : index
    %c0_71 = arith.constant 0 : index
    %c0_72 = arith.constant 0 : index
    %c0_73 = arith.constant 0 : index
    %59 = vector.load %arg10[%c0_68, %c1_69, %c0_70, %c0_71, %c0_72, %c0_73] : memref<1x2x2x5x8x16xf32, #tpu.memory_space<vmem>>, vector<1x1x1x4x4x16xf32>
    %60 = vector.shape_cast %59 : vector<1x1x1x4x4x16xf32> to vector<1x4x4x16xf32>
    %c1_74 = arith.constant 1 : index
    %c0_75 = arith.constant 0 : index
    %c0_76 = arith.constant 0 : index
    %61 = vector.load %arg3[%c1_74, %c0_75, %c0_76] : memref<3x3x16xf32, #tpu.memory_space<vmem>>, vector<1x1x16xf32>
    %62 = vector.shape_cast %61 : vector<1x1x16xf32> to vector<16xf32>
    %63 = vector.shape_cast %62 : vector<16xf32> to vector<1x1x1x16xf32>
    %64 = vector.broadcast %63 : vector<1x1x1x16xf32> to vector<1x4x4x16xf32>
    %65 = arith.mulf %60, %64 : vector<1x4x4x16xf32>
    %66 = arith.addf %50, %65 : vector<1x4x4x16xf32>
    %c0_77 = arith.constant 0 : index
    %c1_78 = arith.constant 1 : index
    %c0_79 = arith.constant 0 : index
    %c0_80 = arith.constant 0 : index
    %c0_81 = arith.constant 0 : index
    %c0_82 = arith.constant 0 : index
    %67 = vector.load %arg1[%c0_77, %c1_78, %c0_79, %c0_80, %c0_81, %c0_82] : memref<1x2x2x5x8x16xf32, #tpu.memory_space<vmem>>, vector<1x1x1x4x4x16xf32>
    %68 = vector.shape_cast %67 : vector<1x1x1x4x4x16xf32> to vector<1x4x4x16xf32>
    %c1_83 = arith.constant 1 : index
    %c0_84 = arith.constant 0 : index
    %c0_85 = arith.constant 0 : index
    %69 = vector.load %arg5[%c1_83, %c0_84, %c0_85] : memref<3x3x16xf32, #tpu.memory_space<vmem>>, vector<1x1x16xf32>
    %70 = vector.shape_cast %69 : vector<1x1x16xf32> to vector<16xf32>
    %71 = vector.shape_cast %70 : vector<16xf32> to vector<1x1x1x16xf32>
    %72 = vector.broadcast %71 : vector<1x1x1x16xf32> to vector<1x4x4x16xf32>
    %73 = arith.mulf %68, %72 : vector<1x4x4x16xf32>
    %74 = arith.addf %58, %73 : vector<1x4x4x16xf32>
    %c0_86 = arith.constant 0 : index
    %c1_87 = arith.constant 1 : index
    %c1_88 = arith.constant 1 : index
    %c0_89 = arith.constant 0 : index
    %c0_90 = arith.constant 0 : index
    %c0_91 = arith.constant 0 : index
    %75 = vector.load %arg10[%c0_86, %c1_87, %c1_88, %c0_89, %c0_90, %c0_91] : memref<1x2x2x5x8x16xf32, #tpu.memory_space<vmem>>, vector<1x1x1x4x4x16xf32>
    %76 = vector.shape_cast %75 : vector<1x1x1x4x4x16xf32> to vector<1x4x4x16xf32>
    %c1_92 = arith.constant 1 : index
    %c1_93 = arith.constant 1 : index
    %c0_94 = arith.constant 0 : index
    %77 = vector.load %arg3[%c1_92, %c1_93, %c0_94] : memref<3x3x16xf32, #tpu.memory_space<vmem>>, vector<1x1x16xf32>
    %78 = vector.shape_cast %77 : vector<1x1x16xf32> to vector<16xf32>
    %79 = vector.shape_cast %78 : vector<16xf32> to vector<1x1x1x16xf32>
    %80 = vector.broadcast %79 : vector<1x1x1x16xf32> to vector<1x4x4x16xf32>
    %81 = arith.mulf %76, %80 : vector<1x4x4x16xf32>
    %82 = arith.addf %66, %81 : vector<1x4x4x16xf32>
    %c0_95 = arith.constant 0 : index
    %c1_96 = arith.constant 1 : index
    %c1_97 = arith.constant 1 : index
    %c0_98 = arith.constant 0 : index
    %c0_99 = arith.constant 0 : index
    %c0_100 = arith.constant 0 : index
    %83 = vector.load %arg1[%c0_95, %c1_96, %c1_97, %c0_98, %c0_99, %c0_100] : memref<1x2x2x5x8x16xf32, #tpu.memory_space<vmem>>, vector<1x1x1x4x4x16xf32>
    %84 = vector.shape_cast %83 : vector<1x1x1x4x4x16xf32> to vector<1x4x4x16xf32>
    %c1_101 = arith.constant 1 : index
    %c1_102 = arith.constant 1 : index
    %c0_103 = arith.constant 0 : index
    %85 = vector.load %arg5[%c1_101, %c1_102, %c0_103] : memref<3x3x16xf32, #tpu.memory_space<vmem>>, vector<1x1x16xf32>
    %86 = vector.shape_cast %85 : vector<1x1x16xf32> to vector<16xf32>
    %87 = vector.shape_cast %86 : vector<16xf32> to vector<1x1x1x16xf32>
    %88 = vector.broadcast %87 : vector<1x1x1x16xf32> to vector<1x4x4x16xf32>
    %89 = arith.mulf %84, %88 : vector<1x4x4x16xf32>
    %90 = arith.addf %74, %89 : vector<1x4x4x16xf32>
    %c0_104 = arith.constant 0 : index
    %c1_105 = arith.constant 1 : index
    %c0_106 = arith.constant 0 : index
    %c0_107 = arith.constant 0 : index
    %c1_108 = arith.constant 1 : index
    %c0_109 = arith.constant 0 : index
    %91 = vector.load %arg10[%c0_104, %c1_105, %c0_106, %c0_107, %c1_108, %c0_109] : memref<1x2x2x5x8x16xf32, #tpu.memory_space<vmem>>, vector<1x1x1x4x4x16xf32>
    %92 = vector.shape_cast %91 : vector<1x1x1x4x4x16xf32> to vector<1x4x4x16xf32>
    %c1_110 = arith.constant 1 : index
    %c2_111 = arith.constant 2 : index
    %c0_112 = arith.constant 0 : index
    %93 = vector.load %arg3[%c1_110, %c2_111, %c0_112] : memref<3x3x16xf32, #tpu.memory_space<vmem>>, vector<1x1x16xf32>
    %94 = vector.shape_cast %93 : vector<1x1x16xf32> to vector<16xf32>
    %95 = vector.shape_cast %94 : vector<16xf32> to vector<1x1x1x16xf32>
    %96 = vector.broadcast %95 : vector<1x1x1x16xf32> to vector<1x4x4x16xf32>
    %97 = arith.mulf %92, %96 : vector<1x4x4x16xf32>
    %98 = arith.addf %82, %97 : vector<1x4x4x16xf32>
    %c0_113 = arith.constant 0 : index
    %c1_114 = arith.constant 1 : index
    %c0_115 = arith.constant 0 : index
    %c0_116 = arith.constant 0 : index
    %c1_117 = arith.constant 1 : index
    %c0_118 = arith.constant 0 : index
    %99 = vector.load %arg1[%c0_113, %c1_114, %c0_115, %c0_116, %c1_117, %c0_118] : memref<1x2x2x5x8x16xf32, #tpu.memory_space<vmem>>, vector<1x1x1x4x4x16xf32>
    %100 = vector.shape_cast %99 : vector<1x1x1x4x4x16xf32> to vector<1x4x4x16xf32>
    %c1_119 = arith.constant 1 : index
    %c2_120 = arith.constant 2 : index
    %c0_121 = arith.constant 0 : index
    %101 = vector.load %arg5[%c1_119, %c2_120, %c0_121] : memref<3x3x16xf32, #tpu.memory_space<vmem>>, vector<1x1x16xf32>
    %102 = vector.shape_cast %101 : vector<1x1x16xf32> to vector<16xf32>
    %103 = vector.shape_cast %102 : vector<16xf32> to vector<1x1x1x16xf32>
    %104 = vector.broadcast %103 : vector<1x1x1x16xf32> to vector<1x4x4x16xf32>
    %105 = arith.mulf %100, %104 : vector<1x4x4x16xf32>
    %106 = arith.addf %90, %105 : vector<1x4x4x16xf32>
    %c0_122 = arith.constant 0 : index
    %c0_123 = arith.constant 0 : index
    %c0_124 = arith.constant 0 : index
    %c1_125 = arith.constant 1 : index
    %c0_126 = arith.constant 0 : index
    %c0_127 = arith.constant 0 : index
    %107 = vector.load %arg10[%c0_122, %c0_123, %c0_124, %c1_125, %c0_126, %c0_127] : memref<1x2x2x5x8x16xf32, #tpu.memory_space<vmem>>, vector<1x1x1x4x4x16xf32>
    %108 = vector.shape_cast %107 : vector<1x1x1x4x4x16xf32> to vector<1x4x4x16xf32>
    %c2_128 = arith.constant 2 : index
    %c0_129 = arith.constant 0 : index
    %c0_130 = arith.constant 0 : index
    %109 = vector.load %arg3[%c2_128, %c0_129, %c0_130] : memref<3x3x16xf32, #tpu.memory_space<vmem>>, vector<1x1x16xf32>
    %110 = vector.shape_cast %109 : vector<1x1x16xf32> to vector<16xf32>
    %111 = vector.shape_cast %110 : vector<16xf32> to vector<1x1x1x16xf32>
    %112 = vector.broadcast %111 : vector<1x1x1x16xf32> to vector<1x4x4x16xf32>
    %113 = arith.mulf %108, %112 : vector<1x4x4x16xf32>
    %114 = arith.addf %98, %113 : vector<1x4x4x16xf32>
    %c0_131 = arith.constant 0 : index
    %c0_132 = arith.constant 0 : index
    %c0_133 = arith.constant 0 : index
    %c1_134 = arith.constant 1 : index
    %c0_135 = arith.constant 0 : index
    %c0_136 = arith.constant 0 : index
    %115 = vector.load %arg1[%c0_131, %c0_132, %c0_133, %c1_134, %c0_135, %c0_136] : memref<1x2x2x5x8x16xf32, #tpu.memory_space<vmem>>, vector<1x1x1x4x4x16xf32>
    %116 = vector.shape_cast %115 : vector<1x1x1x4x4x16xf32> to vector<1x4x4x16xf32>
    %c2_137 = arith.constant 2 : index
    %c0_138 = arith.constant 0 : index
    %c0_139 = arith.constant 0 : index
    %117 = vector.load %arg5[%c2_137, %c0_138, %c0_139] : memref<3x3x16xf32, #tpu.memory_space<vmem>>, vector<1x1x16xf32>
    %118 = vector.shape_cast %117 : vector<1x1x16xf32> to vector<16xf32>
    %119 = vector.shape_cast %118 : vector<16xf32> to vector<1x1x1x16xf32>
    %120 = vector.broadcast %119 : vector<1x1x1x16xf32> to vector<1x4x4x16xf32>
    %121 = arith.mulf %116, %120 : vector<1x4x4x16xf32>
    %122 = arith.addf %106, %121 : vector<1x4x4x16xf32>
    %c0_140 = arith.constant 0 : index
    %c0_141 = arith.constant 0 : index
    %c1_142 = arith.constant 1 : index
    %c1_143 = arith.constant 1 : index
    %c0_144 = arith.constant 0 : index
    %c0_145 = arith.constant 0 : index
    %123 = vector.load %arg10[%c0_140, %c0_141, %c1_142, %c1_143, %c0_144, %c0_145] : memref<1x2x2x5x8x16xf32, #tpu.memory_space<vmem>>, vector<1x1x1x4x4x16xf32>
    %124 = vector.shape_cast %123 : vector<1x1x1x4x4x16xf32> to vector<1x4x4x16xf32>
    %c2_146 = arith.constant 2 : index
    %c1_147 = arith.constant 1 : index
    %c0_148 = arith.constant 0 : index
    %125 = vector.load %arg3[%c2_146, %c1_147, %c0_148] : memref<3x3x16xf32, #tpu.memory_space<vmem>>, vector<1x1x16xf32>
    %126 = vector.shape_cast %125 : vector<1x1x16xf32> to vector<16xf32>
    %127 = vector.shape_cast %126 : vector<16xf32> to vector<1x1x1x16xf32>
    %128 = vector.broadcast %127 : vector<1x1x1x16xf32> to vector<1x4x4x16xf32>
    %129 = arith.mulf %124, %128 : vector<1x4x4x16xf32>
    %130 = arith.addf %114, %129 : vector<1x4x4x16xf32>
    %c0_149 = arith.constant 0 : index
    %c0_150 = arith.constant 0 : index
    %c1_151 = arith.constant 1 : index
    %c1_152 = arith.constant 1 : index
    %c0_153 = arith.constant 0 : index
    %c0_154 = arith.constant 0 : index
    %131 = vector.load %arg1[%c0_149, %c0_150, %c1_151, %c1_152, %c0_153, %c0_154] : memref<1x2x2x5x8x16xf32, #tpu.memory_space<vmem>>, vector<1x1x1x4x4x16xf32>
    %132 = vector.shape_cast %131 : vector<1x1x1x4x4x16xf32> to vector<1x4x4x16xf32>
    %c2_155 = arith.constant 2 : index
    %c1_156 = arith.constant 1 : index
    %c0_157 = arith.constant 0 : index
    %133 = vector.load %arg5[%c2_155, %c1_156, %c0_157] : memref<3x3x16xf32, #tpu.memory_space<vmem>>, vector<1x1x16xf32>
    %134 = vector.shape_cast %133 : vector<1x1x16xf32> to vector<16xf32>
    %135 = vector.shape_cast %134 : vector<16xf32> to vector<1x1x1x16xf32>
    %136 = vector.broadcast %135 : vector<1x1x1x16xf32> to vector<1x4x4x16xf32>
    %137 = arith.mulf %132, %136 : vector<1x4x4x16xf32>
    %138 = arith.addf %122, %137 : vector<1x4x4x16xf32>
    %c0_158 = arith.constant 0 : index
    %c0_159 = arith.constant 0 : index
    %c0_160 = arith.constant 0 : index
    %c1_161 = arith.constant 1 : index
    %c1_162 = arith.constant 1 : index
    %c0_163 = arith.constant 0 : index
    %139 = vector.load %arg10[%c0_158, %c0_159, %c0_160, %c1_161, %c1_162, %c0_163] : memref<1x2x2x5x8x16xf32, #tpu.memory_space<vmem>>, vector<1x1x1x4x4x16xf32>
    %140 = vector.shape_cast %139 : vector<1x1x1x4x4x16xf32> to vector<1x4x4x16xf32>
    %c2_164 = arith.constant 2 : index
    %c2_165 = arith.constant 2 : index
    %c0_166 = arith.constant 0 : index
    %141 = vector.load %arg3[%c2_164, %c2_165, %c0_166] : memref<3x3x16xf32, #tpu.memory_space<vmem>>, vector<1x1x16xf32>
    %142 = vector.shape_cast %141 : vector<1x1x16xf32> to vector<16xf32>
    %143 = vector.shape_cast %142 : vector<16xf32> to vector<1x1x1x16xf32>
    %144 = vector.broadcast %143 : vector<1x1x1x16xf32> to vector<1x4x4x16xf32>
    %145 = arith.mulf %140, %144 : vector<1x4x4x16xf32>
    %146 = arith.addf %130, %145 : vector<1x4x4x16xf32>
    %c0_167 = arith.constant 0 : index
    %c0_168 = arith.constant 0 : index
    %c0_169 = arith.constant 0 : index
    %c1_170 = arith.constant 1 : index
    %c1_171 = arith.constant 1 : index
    %c0_172 = arith.constant 0 : index
    %147 = vector.load %arg1[%c0_167, %c0_168, %c0_169, %c1_170, %c1_171, %c0_172] : memref<1x2x2x5x8x16xf32, #tpu.memory_space<vmem>>, vector<1x1x1x4x4x16xf32>
    %148 = vector.shape_cast %147 : vector<1x1x1x4x4x16xf32> to vector<1x4x4x16xf32>
    %c2_173 = arith.constant 2 : index
    %c2_174 = arith.constant 2 : index
    %c0_175 = arith.constant 0 : index
    %149 = vector.load %arg5[%c2_173, %c2_174, %c0_175] : memref<3x3x16xf32, #tpu.memory_space<vmem>>, vector<1x1x16xf32>
    %150 = vector.shape_cast %149 : vector<1x1x16xf32> to vector<16xf32>
    %151 = vector.shape_cast %150 : vector<16xf32> to vector<1x1x1x16xf32>
    %152 = vector.broadcast %151 : vector<1x1x1x16xf32> to vector<1x4x4x16xf32>
    %153 = arith.mulf %148, %152 : vector<1x4x4x16xf32>
    %154 = arith.addf %138, %153 : vector<1x4x4x16xf32>
    %c0_176 = arith.constant 0 : index
    %c0_177 = arith.constant 0 : index
    %155 = vector.load %arg4[%c0_176, %c0_177] : memref<1x16xf32, #tpu.memory_space<vmem>>, vector<1x16xf32>
    %156 = vector.shape_cast %155 : vector<1x16xf32> to vector<16xf32>
    %157 = vector.shape_cast %156 : vector<16xf32> to vector<1x1x1x16xf32>
    %158 = vector.broadcast %157 : vector<1x1x1x16xf32> to vector<1x4x4x16xf32>
    %159 = arith.addf %146, %158 : vector<1x4x4x16xf32>
    %c0_178 = arith.constant 0 : index
    %c0_179 = arith.constant 0 : index
    %160 = vector.load %arg6[%c0_178, %c0_179] : memref<1x16xf32, #tpu.memory_space<vmem>>, vector<1x16xf32>
    %161 = vector.shape_cast %160 : vector<1x16xf32> to vector<16xf32>
    %162 = vector.shape_cast %161 : vector<16xf32> to vector<1x1x1x16xf32>
    %163 = vector.broadcast %162 : vector<1x1x1x16xf32> to vector<1x4x4x16xf32>
    %164 = arith.addf %154, %163 : vector<1x4x4x16xf32>
    %165 = vector.extract_strided_slice %164 {offsets = [0, 0, 0, 0], sizes = [1, 1, 4, 16], strides = [1, 1, 1, 1]} : vector<1x4x4x16xf32> to vector<1x1x4x16xf32>
    %166 = vector.shape_cast %165 : vector<1x1x4x16xf32> to vector<4x16xf32>
    %c0_180 = arith.constant 0 : index
    %c0_181 = arith.constant 0 : index
    %c0_182 = arith.constant 0 : index
    %167 = vector.load %arg11[%c0_180, %c0_181, %c0_182] : memref<1x16x32xf32, #tpu.memory_space<vmem>>, vector<1x4x16xf32>
    %168 = vector.shape_cast %167 : vector<1x4x16xf32> to vector<4x16xf32>
    %169 = vector.shape_cast %166 : vector<4x16xf32> to vector<1x4x16xf32>
    tpu.vector_store %arg11[%c0_180, %c0_181, %c0_182], %169 {strides = array<i32>} : memref<1x16x32xf32, #tpu.memory_space<vmem>>, vector<1x4x16xf32>,
    %170 = vector.extract_strided_slice %159 {offsets = [0, 0, 0, 0], sizes = [1, 1, 4, 16], strides = [1, 1, 1, 1]} : vector<1x4x4x16xf32> to vector<1x1x4x16xf32>
    %171 = vector.shape_cast %170 : vector<1x1x4x16xf32> to vector<4x16xf32>
    %c0_183 = arith.constant 0 : index
    %c0_184 = arith.constant 0 : index
    %c16 = arith.constant 16 : index
    %172 = vector.load %arg11[%c0_183, %c0_184, %c16] : memref<1x16x32xf32, #tpu.memory_space<vmem>>, vector<1x4x16xf32>
    %173 = vector.shape_cast %172 : vector<1x4x16xf32> to vector<4x16xf32>
    %174 = vector.shape_cast %171 : vector<4x16xf32> to vector<1x4x16xf32>
    tpu.vector_store %arg11[%c0_183, %c0_184, %c16], %174 {strides = array<i32>} : memref<1x16x32xf32, #tpu.memory_space<vmem>>, vector<1x4x16xf32>,
    %175 = vector.extract_strided_slice %164 {offsets = [0, 1, 0, 0], sizes = [1, 1, 4, 16], strides = [1, 1, 1, 1]} : vector<1x4x4x16xf32> to vector<1x1x4x16xf32>
    %176 = vector.shape_cast %175 : vector<1x1x4x16xf32> to vector<4x16xf32>
    %c0_185 = arith.constant 0 : index
    %c4 = arith.constant 4 : index
    %c0_186 = arith.constant 0 : index
    %177 = vector.load %arg11[%c0_185, %c4, %c0_186] : memref<1x16x32xf32, #tpu.memory_space<vmem>>, vector<1x4x16xf32>
    %178 = vector.shape_cast %177 : vector<1x4x16xf32> to vector<4x16xf32>
    %179 = vector.shape_cast %176 : vector<4x16xf32> to vector<1x4x16xf32>
    tpu.vector_store %arg11[%c0_185, %c4, %c0_186], %179 {strides = array<i32>} : memref<1x16x32xf32, #tpu.memory_space<vmem>>, vector<1x4x16xf32>,
    %180 = vector.extract_strided_slice %159 {offsets = [0, 1, 0, 0], sizes = [1, 1, 4, 16], strides = [1, 1, 1, 1]} : vector<1x4x4x16xf32> to vector<1x1x4x16xf32>
    %181 = vector.shape_cast %180 : vector<1x1x4x16xf32> to vector<4x16xf32>
    %c0_187 = arith.constant 0 : index
    %c4_188 = arith.constant 4 : index
    %c16_189 = arith.constant 16 : index
    %182 = vector.load %arg11[%c0_187, %c4_188, %c16_189] : memref<1x16x32xf32, #tpu.memory_space<vmem>>, vector<1x4x16xf32>
    %183 = vector.shape_cast %182 : vector<1x4x16xf32> to vector<4x16xf32>
    %184 = vector.shape_cast %181 : vector<4x16xf32> to vector<1x4x16xf32>
    tpu.vector_store %arg11[%c0_187, %c4_188, %c16_189], %184 {strides = array<i32>} : memref<1x16x32xf32, #tpu.memory_space<vmem>>, vector<1x4x16xf32>,
    %185 = vector.extract_strided_slice %164 {offsets = [0, 2, 0, 0], sizes = [1, 1, 4, 16], strides = [1, 1, 1, 1]} : vector<1x4x4x16xf32> to vector<1x1x4x16xf32>
    %186 = vector.shape_cast %185 : vector<1x1x4x16xf32> to vector<4x16xf32>
    %c0_190 = arith.constant 0 : index
    %c8 = arith.constant 8 : index
    %c0_191 = arith.constant 0 : index
    %187 = vector.load %arg11[%c0_190, %c8, %c0_191] : memref<1x16x32xf32, #tpu.memory_space<vmem>>, vector<1x4x16xf32>
    %188 = vector.shape_cast %187 : vector<1x4x16xf32> to vector<4x16xf32>
    %189 = vector.shape_cast %186 : vector<4x16xf32> to vector<1x4x16xf32>
    tpu.vector_store %arg11[%c0_190, %c8, %c0_191], %189 {strides = array<i32>} : memref<1x16x32xf32, #tpu.memory_space<vmem>>, vector<1x4x16xf32>,
    %190 = vector.extract_strided_slice %159 {offsets = [0, 2, 0, 0], sizes = [1, 1, 4, 16], strides = [1, 1, 1, 1]} : vector<1x4x4x16xf32> to vector<1x1x4x16xf32>
    %191 = vector.shape_cast %190 : vector<1x1x4x16xf32> to vector<4x16xf32>
    %c0_192 = arith.constant 0 : index
    %c8_193 = arith.constant 8 : index
    %c16_194 = arith.constant 16 : index
    %192 = vector.load %arg11[%c0_192, %c8_193, %c16_194] : memref<1x16x32xf32, #tpu.memory_space<vmem>>, vector<1x4x16xf32>
    %193 = vector.shape_cast %192 : vector<1x4x16xf32> to vector<4x16xf32>
    %194 = vector.shape_cast %191 : vector<4x16xf32> to vector<1x4x16xf32>
    tpu.vector_store %arg11[%c0_192, %c8_193, %c16_194], %194 {strides = array<i32>} : memref<1x16x32xf32, #tpu.memory_space<vmem>>, vector<1x4x16xf32>,
    %195 = vector.extract_strided_slice %164 {offsets = [0, 3, 0, 0], sizes = [1, 1, 4, 16], strides = [1, 1, 1, 1]} : vector<1x4x4x16xf32> to vector<1x1x4x16xf32>
    %196 = vector.shape_cast %195 : vector<1x1x4x16xf32> to vector<4x16xf32>
    %c0_195 = arith.constant 0 : index
    %c12 = arith.constant 12 : index
    %c0_196 = arith.constant 0 : index
    %197 = vector.load %arg11[%c0_195, %c12, %c0_196] : memref<1x16x32xf32, #tpu.memory_space<vmem>>, vector<1x4x16xf32>
    %198 = vector.shape_cast %197 : vector<1x4x16xf32> to vector<4x16xf32>
    %199 = vector.shape_cast %196 : vector<4x16xf32> to vector<1x4x16xf32>
    tpu.vector_store %arg11[%c0_195, %c12, %c0_196], %199 {strides = array<i32>} : memref<1x16x32xf32, #tpu.memory_space<vmem>>, vector<1x4x16xf32>,
    %200 = vector.extract_strided_slice %159 {offsets = [0, 3, 0, 0], sizes = [1, 1, 4, 16], strides = [1, 1, 1, 1]} : vector<1x4x4x16xf32> to vector<1x1x4x16xf32>
    %201 = vector.shape_cast %200 : vector<1x1x4x16xf32> to vector<4x16xf32>
    %c0_197 = arith.constant 0 : index
    %c12_198 = arith.constant 12 : index
    %c16_199 = arith.constant 16 : index
    %202 = vector.load %arg11[%c0_197, %c12_198, %c16_199] : memref<1x16x32xf32, #tpu.memory_space<vmem>>, vector<1x4x16xf32>
    %203 = vector.shape_cast %202 : vector<1x4x16xf32> to vector<4x16xf32>
    %204 = vector.shape_cast %201 : vector<4x16xf32> to vector<1x4x16xf32>
    tpu.vector_store %arg11[%c0_197, %c12_198, %c16_199], %204 {strides = array<i32>} : memref<1x16x32xf32, #tpu.memory_space<vmem>>, vector<1x4x16xf32>,
    %c0_200 = arith.constant 0 : index
    %c0_201 = arith.constant 0 : index
    %c0_202 = arith.constant 0 : index
    %205 = vector.load %arg11[%c0_200, %c0_201, %c0_202] : memref<1x16x32xf32, #tpu.memory_space<vmem>>, vector<1x16x32xf32>
    %206 = vector.shape_cast %205 : vector<1x16x32xf32> to vector<16x32xf32>
    %207 = arith.truncf %206 : vector<16x32xf32> to vector<16x32xbf16>
    %c0_203 = arith.constant 0 : index
    %c0_204 = arith.constant 0 : index
    %208 = vector.load %arg7[%c0_203, %c0_204] : memref<32x32xbf16, #tpu.memory_space<vmem>>, vector<32x32xbf16>
    %cst_205 = arith.constant dense<0.000000e+00> : vector<16x32xf32>
    %209 = tpu.matmul %207, %208, %cst_205 {dimension_numbers = #tpu.dot_dimension_numbers<[1], [0], [0], [1], [0, 0, 1, 1], [], []>} : vector<16x32xbf16>, vector<32x32xbf16>, vector<16x32xf32> -> vector<16x32xf32>
    %c0_206 = arith.constant 0 : index
    %c0_207 = arith.constant 0 : index
    %210 = vector.load %arg8[%c0_206, %c0_207] : memref<1x32xf32, #tpu.memory_space<vmem>>, vector<1x32xf32>
    %211 = vector.shape_cast %210 : vector<1x32xf32> to vector<32xf32>
    %212 = vector.shape_cast %211 : vector<32xf32> to vector<1x32xf32>
    %213 = vector.broadcast %212 : vector<1x32xf32> to vector<16x32xf32>
    %214 = arith.addf %209, %213 : vector<16x32xf32>
    %cst_208 = arith.constant 0.000000e+00 : f32
    %215 = vector.broadcast %cst_208 : f32 to vector<16x32xf32>
    %216 = arith.maximumf %214, %215 : vector<16x32xf32>
    %217 = vector.shape_cast %216 : vector<16x32xf32> to vector<1x16x32xf32>
    %c0_209 = arith.constant 0 : index
    %c0_210 = arith.constant 0 : index
    %c0_211 = arith.constant 0 : index
    %218 = vector.load %arg9[%c0_209, %c0_210, %c0_211] : memref<1x16x32xf32, #tpu.memory_space<vmem>>, vector<1x16x32xf32>
    tpu.vector_store %arg9[%c0_209, %c0_210, %c0_211], %217 {strides = array<i32>} : memref<1x16x32xf32, #tpu.memory_space<vmem>>, vector<1x16x32xf32>,
    return
  }
  func.func @transform_0(%arg0: i32) -> (i32, i32, i32, i32, i32, i32) {
    %c0_i32 = arith.constant 0 : i32
    %c0_i32_0 = arith.constant 0 : i32
    %c0_i32_1 = arith.constant 0 : i32
    %c0_i32_2 = arith.constant 0 : i32
    %c0_i32_3 = arith.constant 0 : i32
    %c0_i32_4 = arith.constant 0 : i32
    return %arg0, %c0_i32, %c0_i32_0, %c0_i32_1, %c0_i32_2, %c0_i32_3 : i32, i32, i32, i32, i32, i32
  }
  func.func @transform_1(%arg0: i32) -> (i32, i32) {
    %c0_i32 = arith.constant 0 : i32
    %c0_i32_0 = arith.constant 0 : i32
    %c0_i32_1 = arith.constant 0 : i32
    return %c0_i32, %c0_i32_0 : i32, i32
  }
  func.func @transform_2(%arg0: i32) -> (i32, i32, i32) {
    %c0_i32 = arith.constant 0 : i32
    %c0_i32_0 = arith.constant 0 : i32
    %c0_i32_1 = arith.constant 0 : i32
    %c0_i32_2 = arith.constant 0 : i32
    return %c0_i32, %c0_i32_0, %c0_i32_1 : i32, i32, i32
  }
  func.func @transform_3(%arg0: i32) -> (i32, i32) {
    %c0_i32 = arith.constant 0 : i32
    %c0_i32_0 = arith.constant 0 : i32
    %c0_i32_1 = arith.constant 0 : i32
    return %c0_i32, %c0_i32_0 : i32, i32
  }
  func.func @transform_4(%arg0: i32) -> (i32, i32, i32) {
    %c0_i32 = arith.constant 0 : i32
    %c0_i32_0 = arith.constant 0 : i32
    %c0_i32_1 = arith.constant 0 : i32
    %c0_i32_2 = arith.constant 0 : i32
    return %c0_i32, %c0_i32_0, %c0_i32_1 : i32, i32, i32
  }
  func.func @transform_5(%arg0: i32) -> (i32, i32) {
    %c0_i32 = arith.constant 0 : i32
    %c0_i32_0 = arith.constant 0 : i32
    %c0_i32_1 = arith.constant 0 : i32
    return %c0_i32, %c0_i32_0 : i32, i32
  }
  func.func @transform_6(%arg0: i32) -> (i32, i32) {
    %c0_i32 = arith.constant 0 : i32
    %c0_i32_0 = arith.constant 0 : i32
    %c0_i32_1 = arith.constant 0 : i32
    return %c0_i32, %c0_i32_0 : i32, i32
  }
  func.func @transform_7(%arg0: i32) -> (i32, i32) {
    %c0_i32 = arith.constant 0 : i32
    %c0_i32_0 = arith.constant 0 : i32
    %c0_i32_1 = arith.constant 0 : i32
    return %c0_i32, %c0_i32_0 : i32, i32
  }
  func.func @transform_8(%arg0: i32) -> (i32, i32, i32) {
    %c0_i32 = arith.constant 0 : i32
    %c0_i32_0 = arith.constant 0 : i32
    %c0_i32_1 = arith.constant 0 : i32
    return %arg0, %c0_i32, %c0_i32_0 : i32, i32, i32
  }
}

</mosaic_0001>

<llo_original>
// kernel: shuffle_stage_forward.3
$region0: #{shuffle_stage_forward.3}
  #allocation0 [shape = 'u32[]', space=smem, size = 0x4, offset = 0x4, fixed_abs, tag = 'smem constant byte address 0x4 - core index']
  #allocation1 [shape = 'u32[144,128]{1,0:T(1,128)}', space=vmem, size = 0x12000, scoped, tag = 'internal scratch']
  #allocation2 [shape = 'f32[1,6,6,16]{3,2,1,0:T(8,128)}', space=vmem, size = 0x6000, scoped, tag = 'scratch operand']
  #allocation3 [shape = 'f32[1,16,16]{2,1,0:T(8,128)}', space=vmem, size = 0x2000, scoped, tag = 'scratch operand']
  %s0 = inlined_call_operand.vmem [shape: f32[2,16,32], index: 0, kind: input, shape index: {}]
  %s1 = inlined_call_operand.vmem [shape: bf16[32,48], index: 1, kind: input, shape index: {}]
  %s2 = inlined_call_operand.vmem [shape: f32[3,3,16], index: 2, kind: input, shape index: {}]
  %s3 = inlined_call_operand.vmem [shape: f32[1,16], index: 3, kind: input, shape index: {}]
  %s4 = inlined_call_operand.vmem [shape: bf16[16,32], index: 4, kind: input, shape index: {}]
  %s5 = inlined_call_operand.vmem [shape: f32[1,32], index: 5, kind: input, shape index: {}]
  %s6 = inlined_call_operand.hbm [shape: f32[2,16,32], index: 6, kind: output, shape index: {}]
  %s7 = sld [smem:[#allocation0]]
  $region57: #{shuffle_stage_forward.3} parent=0
    _
  %s9 = ssub.s32 1, %s7
  %s10 = scalar_select 0, %s9, %s7
  $region1: #{shuffle_stage_forward.3} parent=0
    #allocation4 [shape = 'u8[16384]{0}', space=vmem, size = 0x4000, scoped, tag = 'output window, operand 0']
    #allocation5 [shape = 's32[2]{0}', space=sflag, size = 0x8, scoped, tag = 'scoped memory for shuffle_stage_forward.3']
    %11 = vsyncpa [#allocation5], 0
    %s12 = scalar_lea.sflag [#allocation5], 1
    %13 = vsyncpa %s12, 0
    loop: start=0, step=1, limit=4
    $region2: #{shuffle_stage_forward.3} parent=1 // loop_pre_header
      _
    $region3: #{shuffle_stage_forward.3} parent=1 // loop_header
      %s15 = sphi 0, %s19
      %p16 = scmp.ge.s32.totalorder %s15, 4
      %s25 = sphi 0, %s27
      %s28 = sphi 0, %s25
      %s29 = sphi 0, %s28
      %s45 = sphi 0, %s29
      %s49 = sphi 0, %s49
      %s51 = sphi 0, %s49
      %s52 = sphi 0, %s51
      %s66 = sphi 0, %s52
      %s70 = sphi 0, %s70
      %s72 = sphi 0, %s70
      %s73 = sphi 0, %s72
      %s87 = sphi 0, %s73
      %s91 = sphi 0, %s91
      %s93 = sphi 0, %s91
      %s94 = sphi 0, %s93
      %s108 = sphi 0, %s94
      %s112 = sphi 0, %s112
      %s114 = sphi 0, %s112
      %s115 = sphi 0, %s114
      %s129 = sphi 0, %s115
      %s133 = sphi 0, %s133
      %s135 = sphi 0, %s133
      %s136 = sphi 0, %s135
      %s150 = sphi 0, %s136
      %s156 = sphi 0, %s158
      %s159 = sphi 0, %s156
      %s160 = sphi 0, %s159
      %s176 = sphi 0, %s160
    $region4: #{shuffle_stage_forward.3} parent=1 // loop_header_branch
      %18 = sbr.rel (%p16) target = $region8
    $region5: #{shuffle_stage_forward.3} parent=1 // loop_body
      %s20 = ssub.s32 %s15, 1
      %s21 = ssub.s32 %s15, 2
      %s22 = sadd.s32 %s15, 1
      %s23 = ssub.s32 %s15, %s22
      %p24 = scmp.eq.s32.totalorder %s23, 0
      %s26 = sadd.s32 %s25, 1
      %s27 = scalar_select %p24, %s25, %s26
      %p30 = pneg %p24
      %p31 = scmp.eq.s32.totalorder %s15, 1
      %p32 = por %p30, %p31
      %p33 = scmp.ne.s32.totalorder %s25, %s28
      %p34 = scmp.eq.s32.totalorder %s15, 0
      %p35 = por %p33, %p34
      %p36 = scmp.ne.s32.totalorder %s25, %s28
      %p37 = scmp.eq.s32.totalorder %s20, 1
      %p38 = por %p36, %p37
      %p39 = scmp.ne.s32.totalorder %s28, %s29
      %p40 = scmp.eq.s32.totalorder %s20, 0
      %p41 = por %p39, %p40
      %p42 = scmp.ne.s32.totalorder %s28, %s29
      %p43 = scmp.eq.s32.totalorder %s21, 1
      %p44 = por %p42, %p43
      %p46 = scmp.ne.s32.totalorder %s29, %s45
      %p47 = scmp.eq.s32.totalorder %s21, 0
      %p48 = por %p46, %p47
      %s50 = sadd.s32 %s49, 1
      %p53 = scmp.eq.s32.totalorder %s15, 1
      %p54 = scmp.ne.s32.totalorder %s49, %s51
      %p55 = scmp.eq.s32.totalorder %s15, 0
      %p56 = por %p54, %p55
      %p57 = scmp.ne.s32.totalorder %s49, %s51
      %p58 = scmp.eq.s32.totalorder %s20, 1
      %p59 = por %p57, %p58
      %p60 = scmp.ne.s32.totalorder %s51, %s52
      %p61 = scmp.eq.s32.totalorder %s20, 0
      %p62 = por %p60, %p61
      %p63 = scmp.ne.s32.totalorder %s51, %s52
      %p64 = scmp.eq.s32.totalorder %s21, 1
      %p65 = por %p63, %p64
      %p67 = scmp.ne.s32.totalorder %s52, %s66
      %p68 = scmp.eq.s32.totalorder %s21, 0
      %p69 = por %p67, %p68
      %s71 = sadd.s32 %s70, 1
      %p74 = scmp.eq.s32.totalorder %s15, 1
      %p75 = scmp.ne.s32.totalorder %s70, %s72
      %p76 = scmp.eq.s32.totalorder %s15, 0
      %p77 = por %p75, %p76
      %p78 = scmp.ne.s32.totalorder %s70, %s72
      %p79 = scmp.eq.s32.totalorder %s20, 1
      %p80 = por %p78, %p79
      %p81 = scmp.ne.s32.totalorder %s72, %s73
      %p82 = scmp.eq.s32.totalorder %s20, 0
      %p83 = por %p81, %p82
      %p84 = scmp.ne.s32.totalorder %s72, %s73
      %p85 = scmp.eq.s32.totalorder %s21, 1
      %p86 = por %p84, %p85
      %p88 = scmp.ne.s32.totalorder %s73, %s87
      %p89 = scmp.eq.s32.totalorder %s21, 0
      %p90 = por %p88, %p89
      %s92 = sadd.s32 %s91, 1
      %p95 = scmp.eq.s32.totalorder %s15, 1
      %p96 = scmp.ne.s32.totalorder %s91, %s93
      %p97 = scmp.eq.s32.totalorder %s15, 0
      %p98 = por %p96, %p97
      %p99 = scmp.ne.s32.totalorder %s91, %s93
      %p100 = scmp.eq.s32.totalorder %s20, 1
      %p101 = por %p99, %p100
      %p102 = scmp.ne.s32.totalorder %s93, %s94
      %p103 = scmp.eq.s32.totalorder %s20, 0
      %p104 = por %p102, %p103
      %p105 = scmp.ne.s32.totalorder %s93, %s94
      %p106 = scmp.eq.s32.totalorder %s21, 1
      %p107 = por %p105, %p106
      %p109 = scmp.ne.s32.totalorder %s94, %s108
      %p110 = scmp.eq.s32.totalorder %s21, 0
      %p111 = por %p109, %p110
      %s113 = sadd.s32 %s112, 1
      %p116 = scmp.eq.s32.totalorder %s15, 1
      %p117 = scmp.ne.s32.totalorder %s112, %s114
      %p118 = scmp.eq.s32.totalorder %s15, 0
      %p119 = por %p117, %p118
      %p120 = scmp.ne.s32.totalorder %s112, %s114
      %p121 = scmp.eq.s32.totalorder %s20, 1
      %p122 = por %p120, %p121
      %p123 = scmp.ne.s32.totalorder %s114, %s115
      %p124 = scmp.eq.s32.totalorder %s20, 0
      %p125 = por %p123, %p124
      %p126 = scmp.ne.s32.totalorder %s114, %s115
      %p127 = scmp.eq.s32.totalorder %s21, 1
      %p128 = por %p126, %p127
      %p130 = scmp.ne.s32.totalorder %s115, %s129
      %p131 = scmp.eq.s32.totalorder %s21, 0
      %p132 = por %p130, %p131
      %s134 = sadd.s32 %s133, 1
      %p137 = scmp.eq.s32.totalorder %s15, 1
      %p138 = scmp.ne.s32.totalorder %s133, %s135
      %p139 = scmp.eq.s32.totalorder %s15, 0
      %p140 = por %p138, %p139
      %p141 = scmp.ne.s32.totalorder %s133, %s135
      %p142 = scmp.eq.s32.totalorder %s20, 1
      %p143 = por %p141, %p142
      %p144 = scmp.ne.s32.totalorder %s135, %s136
      %p145 = scmp.eq.s32.totalorder %s20, 0
      %p146 = por %p144, %p145
      %p147 = scmp.ne.s32.totalorder %s135, %s136
      %p148 = scmp.eq.s32.totalorder %s21, 1
      %p149 = por %p147, %p148
      %p151 = scmp.ne.s32.totalorder %s136, %s150
      %p152 = scmp.eq.s32.totalorder %s21, 0
      %p153 = por %p151, %p152
      %s154 = ssub.s32 %s15, %s22
      %p155 = scmp.eq.s32.totalorder %s154, 0
      %s157 = sadd.s32 %s156, 1
      %s158 = scalar_select %p155, %s156, %s157
      %p161 = pneg %p155
      %p162 = scmp.eq.s32.totalorder %s15, 1
      %p163 = por %p161, %p162
      %p164 = scmp.ne.s32.totalorder %s156, %s159
      %p165 = scmp.eq.s32.totalorder %s15, 0
      %p166 = por %p164, %p165
      %p167 = scmp.ne.s32.totalorder %s156, %s159
      %p168 = scmp.eq.s32.totalorder %s20, 1
      %p169 = por %p167, %p168
      %p170 = scmp.ne.s32.totalorder %s159, %s160
      %p171 = scmp.eq.s32.totalorder %s20, 0
      %p172 = por %p170, %p171
      %p173 = scmp.ne.s32.totalorder %s159, %s160
      %p174 = scmp.eq.s32.totalorder %s21, 1
      %p175 = por %p173, %p174
      %p177 = scmp.ne.s32.totalorder %s160, %s176
      %p178 = scmp.eq.s32.totalorder %s21, 0
      %p179 = por %p177, %p178
      %p180 = scmp.le.s32.totalorder 1, %s15
      %p181 = scmp.lt.s32.totalorder %s15, 3
      %p182 = pnand %p180, %p181
      %p183 = pneg %p182
      // Predicated region
      $region9: #{shuffle_stage_forward.3} parent=5 // pred_check
        _
      $region10: #{shuffle_stage_forward.3} parent=5 // pred_check_branch
        %185 = sbr.rel (%p182) target = $region12
      $region11: #{shuffle_stage_forward.3} parent=5 // pred_region
        %s186 = ssub.s32 %s15, 1
        // Predicated region
        $region13: #{shuffle_stage_forward.3} parent=11 // pred_check
          %p187 = pneg %p62
        $region14: #{shuffle_stage_forward.3} parent=11 // pred_check_branch
          %189 = sbr.rel (%p187) target = $region16
        $region15: #{shuffle_stage_forward.3} parent=11 // pred_region
          _
        $region16: #{shuffle_stage_forward.3} parent=11 // pred_fallthru
          _
        // Predicated region
        $region17: #{shuffle_stage_forward.3} parent=11 // pred_check
          %p190 = pneg %p83
        $region18: #{shuffle_stage_forward.3} parent=11 // pred_check_branch
          %192 = sbr.rel (%p190) target = $region20
        $region19: #{shuffle_stage_forward.3} parent=11 // pred_region
          _
        $region20: #{shuffle_stage_forward.3} parent=11 // pred_fallthru
          _
        // Predicated region
        $region21: #{shuffle_stage_forward.3} parent=11 // pred_check
          %p193 = pneg %p104
        $region22: #{shuffle_stage_forward.3} parent=11 // pred_check_branch
          %195 = sbr.rel (%p193) target = $region24
        $region23: #{shuffle_stage_forward.3} parent=11 // pred_region
          _
        $region24: #{shuffle_stage_forward.3} parent=11 // pred_fallthru
          _
        // Predicated region
        $region25: #{shuffle_stage_forward.3} parent=11 // pred_check
          %p196 = pneg %p125
        $region26: #{shuffle_stage_forward.3} parent=11 // pred_check_branch
          %198 = sbr.rel (%p196) target = $region28
        $region27: #{shuffle_stage_forward.3} parent=11 // pred_region
          _
        $region28: #{shuffle_stage_forward.3} parent=11 // pred_fallthru
          _
        // Predicated region
        $region29: #{shuffle_stage_forward.3} parent=11 // pred_check
          %p199 = pneg %p146
        $region30: #{shuffle_stage_forward.3} parent=11 // pred_check_branch
          %201 = sbr.rel (%p199) target = $region32
        $region31: #{shuffle_stage_forward.3} parent=11 // pred_region
          _
        $region32: #{shuffle_stage_forward.3} parent=11 // pred_fallthru
          _
      $region12: #{shuffle_stage_forward.3} parent=5 // pred_fallthru
        _
      %p202 = scmp.lt.s32.totalorder %s15, 2
      // Predicated region
      $region33: #{shuffle_stage_forward.3} parent=5 // pred_check
        %p203 = pneg %p202
      $region34: #{shuffle_stage_forward.3} parent=5 // pred_check_branch
        %205 = sbr.rel (%p203) target = $region36
      $region35: #{shuffle_stage_forward.3} parent=5 // pred_region
        // Predicated region
        $region37: #{shuffle_stage_forward.3} parent=35 // pred_check
          %p206 = pneg %p35
        $region38: #{shuffle_stage_forward.3} parent=35 // pred_check_branch
          %208 = sbr.rel (%p206) target = $region40
        $region39: #{shuffle_stage_forward.3} parent=35 // pred_region
          %p209 = scmp.lt.s32.totalorder %s15, 1
          %s210 = scalar_select %p209, %s15, 1
          %s211 = smul.addr %s210, 2
          %s212 = smul.addr %s211, 8
          %s213 = scalar_lea.vmem %s0, %s212
        $region40: #{shuffle_stage_forward.3} parent=35 // pred_fallthru
          _
      $region36: #{shuffle_stage_forward.3} parent=5 // pred_fallthru
        _
      %p214 = scmp.le.s32.totalorder 1, %s15
      %p215 = scmp.lt.s32.totalorder %s15, 3
      %p216 = pnand %p214, %p215
      %p217 = pneg %p216
      // Predicated region
      $region41: #{shuffle_stage_forward.3} parent=5 // pred_check
        _
      $region42: #{shuffle_stage_forward.3} parent=5 // pred_check_branch
        %219 = sbr.rel (%p216) target = $region44
      $region43: #{shuffle_stage_forward.3} parent=5 // pred_region
        %s220 = ssub.s32 %s15, 1
        %p221 = scmp.lt.s32.totalorder %s20, 1
        %s222 = scalar_select %p221, %s20, 1
        %s223 = smul.addr %s222, 2
        %s224 = smul.addr %s223, 8
        %s225 = scalar_lea.vmem %s0, %s224
        %p226 = pneg %p41
        %p227 = pneg %p38
        %p228 = pneg %p62
        %p229 = pneg %p59
        %p230 = pneg %p83
        %p231 = pneg %p80
        %p232 = pneg %p104
        %p233 = pneg %p101
        %p234 = pneg %p125
        %p235 = pneg %p122
        %p236 = pneg %p146
        %p237 = pneg %p143
        %p238 = pneg %p172
        %p239 = pneg %p169
        %s240 = sand.u32 %s159, 1
        %s241 = scalar_lea.sflag [#allocation5], %s240
        %s242 = sand.u32 %s159, 1
        %s243 = smul.addr %s242, 16
        %s244 = scalar_lea.vmem [#allocation4], %s243
        %p245 = scmp.lt.s32.totalorder %s20, 1
        %s246 = scalar_select %p245, %s20, 1
        %s247 = smul.addr %s246, 2
        %s248 = smul.addr %s247, 8
        %s249 = scalar_lea.vmem %s0, %s248
        %v251 = vld [vmem:[%s249] sm:$0xff]
        %v252 = vld [vmem:[%s249 + $0x8] sm:$0xff]
        %v253 = vpack.c.bf16 %v252, %v251
        %v254 = vld [vmem:[%s1] sm:$0xf]
        %v255 = vld [vmem:[%s1 + $0x4] sm:$0xf]
        %v256 = vld [vmem:[%s1 + $0x8] sm:$0xf]
        %v257 = vld [vmem:[%s1 + $0xc] sm:$0xf]
        %v262 = vunpack.c.l.b16 %v254
        %v263 = vunpack.c.l.b16 %v255
        %v264 = vunpack.c.l.b16 %v256
        %v265 = vunpack.c.l.b16 %v257
        %v266 = vpack.c.b16 %v263, %v262
        %v267 = vpack.c.b16 %v265, %v264
        %vm270 = vcmask 261120
        %v272 = vsel %vm270, %v253, 0
        %274 = vmatprep.subr.bf16.mxu0 0
        %275 = vmatpush1.bf16.msra.mxu0 %v266
        %276 = vmatprep.subr.bf16.mxu0 0
        %277 = vmatpush1.bf16.msra.mxu0 %v267
        %278 = vmatprep.subr.bf16.mxu0 0
        %279 = vmatpush1.bf16.msra.mxu0 0
        %280 = vmatprep.subr.bf16.mxu0 0
        %281 = vmatpush1.bf16.msra.mxu0 0
        %282 = vmatprep.subr.bf16.mxu0 0
        %283 = vmatpush1.bf16.msra.mxu0 0
        %284 = vmatprep.subr.bf16.mxu0 0
        %285 = vmatpush1.bf16.msra.mxu0 0
        %286 = vmatprep.subr.bf16.mxu0 0
        %287 = vmatpush1.bf16.msra.mxu0 0
        %288 = vmatprep.subr.bf16.mxu0 0
        %289 = vmatpush1.bf16.msra.mxu0 0
        %290 = vmatprep.subr.bf16.mxu0 0
        %291 = vmatpush1.bf16.msra.mxu0 0
        %292 = vmatprep.subr.bf16.mxu0 0
        %293 = vmatpush1.bf16.msra.mxu0 0
        %294 = vmatprep.subr.bf16.mxu0 0
        %295 = vmatpush1.bf16.msra.mxu0 0
        %296 = vmatprep.subr.bf16.mxu0 0
        %297 = vmatpush1.bf16.msra.mxu0 0
        %298 = vmatprep.subr.bf16.mxu0 0
        %299 = vmatpush1.bf16.msra.mxu0 0
        %300 = vmatprep.subr.bf16.mxu0 0
        %301 = vmatpush1.bf16.msra.mxu0 0
        %302 = vmatprep.subr.bf16.mxu0 0
        %303 = vmatpush1.bf16.msra.mxu0 0
        %304 = vmatprep.subr.bf16.mxu0 0
        %305 = vmatpush1.bf16.msra.mxu0 0
        %306 = vmatprep.mubr.bf16.mxu0 0
        %307 = vmatmul.mubr.bf16.gmra.mrb[0].mxu0 %v272
        %v308 = vpop.f32.mrb[0].mxu0
        %v309 = vadd.f32 0.0, %v308
        %v310 = vpop.f32.mrb[0].mxu0
        %v311 = vpop.f32.mrb[0].mxu0
        %v312 = vadd.f32 0.0, %v311
        %v313 = vpop.f32.mrb[0].mxu0
        %314 = vdwg.mxu0
        %v315 = vmax.f32 %v309, 0.0
        %v316 = vmax.f32 %v312, 0.0
        %vm317 = vcmask 130048
        %318 = vst.msk [vmem:[#allocation3] sm:$0xff] %vm317, %v315
        %319 = vst.msk [vmem:[#allocation3 + $0x8] sm:$0xff] %vm317, %v316
        %vm320 = vcmask 128000
        %321 = vst.msk [vmem:[#allocation2] sm:$0x3f] %vm320, 0.0
        %322 = vst.msk [vmem:[#allocation2 + $0x8] sm:$0x3f] %vm320, 0.0
        %323 = vst.msk [vmem:[#allocation2 + $0x10] sm:$0x3f] %vm320, 0.0
        %324 = vst.msk [vmem:[#allocation2 + $0x18] sm:$0x3f] %vm320, 0.0
        %325 = vst.msk [vmem:[#allocation2 + $0x20] sm:$0x3f] %vm320, 0.0
        %326 = vst.msk [vmem:[#allocation2 + $0x28] sm:$0x3f] %vm320, 0.0
        %v327 = vld [vmem:[#allocation3] sm:$0xf]
        %s328 = scalar_lea.vmem [#allocation2], 8
        %vm329 = vcmask 125952
        %330 = vst.msk [vmem:[%s328 + $0x1] sm:$0xf] %vm329, %v327
        %v331 = vld [vmem:[#allocation3 + $0x4] sm:$0xf]
        %s332 = scalar_lea.vmem [#allocation2], 16
        %333 = vst.msk [vmem:[%s332 + $0x1] sm:$0xf] %vm329, %v331
        %v334 = vld [vmem:[#allocation3 + $0x8] sm:$0xf]
        %s335 = scalar_lea.vmem [#allocation2], 24
        %336 = vst.msk [vmem:[%s335 + $0x1] sm:$0xf] %vm329, %v334
        %v337 = vld [vmem:[#allocation3 + $0xc] sm:$0xf]
        %s338 = scalar_lea.vmem [#allocation2], 32
        %339 = vst.msk [vmem:[%s338 + $0x1] sm:$0xf] %vm329, %v337
        %v340 = vld [vmem:[#allocation2] sm:$0xf]
        %v341 = vld [vmem:[#allocation2 + $0x8] sm:$0xf]
        %v342 = vld [vmem:[#allocation2 + $0x10] sm:$0xf]
        %v343 = vld [vmem:[#allocation2 + $0x18] sm:$0xf]
        %v344 = vld [vmem:[%s2] sm:$0x1]
        %v345 = vlaneseq
        %v346 = vshrl.u32 %v345, 7
        %v347 = vsub.s32 0, %v346
        %v348 = vrot.slane %v344, %v347
        %v349 = vmul.f32 %v340, %v348
        %v350 = vmul.f32 %v341, %v348
        %v351 = vmul.f32 %v342, %v348
        %v352 = vmul.f32 %v343, %v348
        %v353 = vadd.f32 %v349, 0.0
        %v354 = vadd.f32 %v350, 0.0
        %v355 = vadd.f32 %v351, 0.0
        %v356 = vadd.f32 %v352, 0.0
        %v357 = vld [vmem:[#allocation2 + $0x1] sm:$0xf]
        %v358 = vld [vmem:[#allocation2 + $0x9] sm:$0xf]
        %v359 = vld [vmem:[#allocation2 + $0x11] sm:$0xf]
        %v360 = vld [vmem:[#allocation2 + $0x19] sm:$0xf]
        %v361 = vld [vmem:[%s2 + $0x1] sm:$0x1]
        %v362 = vlaneseq
        %v363 = vshrl.u32 %v362, 7
        %v364 = vsub.s32 0, %v363
        %v365 = vrot.slane %v361, %v364
        %v366 = vmul.f32 %v357, %v365
        %v367 = vmul.f32 %v358, %v365
        %v368 = vmul.f32 %v359, %v365
        %v369 = vmul.f32 %v360, %v365
        %v370 = vadd.f32 %v353, %v366
        %v371 = vadd.f32 %v354, %v367
        %v372 = vadd.f32 %v355, %v368
        %v373 = vadd.f32 %v356, %v369
        %v374 = vld [vmem:[#allocation2 + $0x2] sm:$0xf]
        %v375 = vld [vmem:[#allocation2 + $0xa] sm:$0xf]
        %v376 = vld [vmem:[#allocation2 + $0x12] sm:$0xf]
        %v377 = vld [vmem:[#allocation2 + $0x1a] sm:$0xf]
        %v378 = vld [vmem:[%s2 + $0x2] sm:$0x1]
        %v379 = vlaneseq
        %v380 = vshrl.u32 %v379, 7
        %v381 = vsub.s32 0, %v380
        %v382 = vrot.slane %v378, %v381
        %v383 = vmul.f32 %v374, %v382
        %v384 = vmul.f32 %v375, %v382
        %v385 = vmul.f32 %v376, %v382
        %v386 = vmul.f32 %v377, %v382
        %v387 = vadd.f32 %v370, %v383
        %v388 = vadd.f32 %v371, %v384
        %v389 = vadd.f32 %v372, %v385
        %v390 = vadd.f32 %v373, %v386
        %v391 = vld [vmem:[%s328] sm:$0xf]
        %v392 = vld [vmem:[%s328 + $0x8] sm:$0xf]
        %v393 = vld [vmem:[%s328 + $0x10] sm:$0xf]
        %v394 = vld [vmem:[%s328 + $0x18] sm:$0xf]
        %s395 = scalar_lea.vmem %s2, 4
        %v396 = vld [vmem:[%s395] sm:$0x1]
        %v397 = vlaneseq
        %v398 = vshrl.u32 %v397, 7
        %v399 = vsub.s32 0, %v398
        %v400 = vrot.slane %v396, %v399
        %v401 = vmul.f32 %v391, %v400
        %v402 = vmul.f32 %v392, %v400
        %v403 = vmul.f32 %v393, %v400
        %v404 = vmul.f32 %v394, %v400
        %v405 = vadd.f32 %v387, %v401
        %v406 = vadd.f32 %v388, %v402
        %v407 = vadd.f32 %v389, %v403
        %v408 = vadd.f32 %v390, %v404
        %v409 = vld [vmem:[%s328 + $0x1] sm:$0xf]
        %v410 = vld [vmem:[%s328 + $0x9] sm:$0xf]
        %v411 = vld [vmem:[%s328 + $0x11] sm:$0xf]
        %v412 = vld [vmem:[%s328 + $0x19] sm:$0xf]
        %v413 = vld [vmem:[%s395 + $0x1] sm:$0x1]
        %v414 = vlaneseq
        %v415 = vshrl.u32 %v414, 7
        %v416 = vsub.s32 0, %v415
        %v417 = vrot.slane %v413, %v416
        %v418 = vmul.f32 %v409, %v417
        %v419 = vmul.f32 %v410, %v417
        %v420 = vmul.f32 %v411, %v417
        %v421 = vmul.f32 %v412, %v417
        %v422 = vadd.f32 %v405, %v418
        %v423 = vadd.f32 %v406, %v419
        %v424 = vadd.f32 %v407, %v420
        %v425 = vadd.f32 %v408, %v421
        %v426 = vld [vmem:[%s328 + $0x2] sm:$0xf]
        %v427 = vld [vmem:[%s328 + $0xa] sm:$0xf]
        %v428 = vld [vmem:[%s328 + $0x12] sm:$0xf]
        %v429 = vld [vmem:[%s328 + $0x1a] sm:$0xf]
        %v430 = vld [vmem:[%s395 + $0x2] sm:$0x1]
        %v431 = vlaneseq
        %v432 = vshrl.u32 %v431, 7
        %v433 = vsub.s32 0, %v432
        %v434 = vrot.slane %v430, %v433
        %v435 = vmul.f32 %v426, %v434
        %v436 = vmul.f32 %v427, %v434
        %v437 = vmul.f32 %v428, %v434
        %v438 = vmul.f32 %v429, %v434
        %v439 = vadd.f32 %v422, %v435
        %v440 = vadd.f32 %v423, %v436
        %v441 = vadd.f32 %v424, %v437
        %v442 = vadd.f32 %v425, %v438
        %v443 = vld [vmem:[%s332] sm:$0xf]
        %v444 = vld [vmem:[%s332 + $0x8] sm:$0xf]
        %v445 = vld [vmem:[%s332 + $0x10] sm:$0xf]
        %v446 = vld [vmem:[%s332 + $0x18] sm:$0xf]
        %s447 = scalar_lea.vmem %s2, 8
        %v448 = vld [vmem:[%s447] sm:$0x1]
        %v449 = vlaneseq
        %v450 = vshrl.u32 %v449, 7
        %v451 = vsub.s32 0, %v450
        %v452 = vrot.slane %v448, %v451
        %v453 = vmul.f32 %v443, %v452
        %v454 = vmul.f32 %v444, %v452
        %v455 = vmul.f32 %v445, %v452
        %v456 = vmul.f32 %v446, %v452
        %v457 = vadd.f32 %v439, %v453
        %v458 = vadd.f32 %v440, %v454
        %v459 = vadd.f32 %v441, %v455
        %v460 = vadd.f32 %v442, %v456
        %v461 = vld [vmem:[%s332 + $0x1] sm:$0xf]
        %v462 = vld [vmem:[%s332 + $0x9] sm:$0xf]
        %v463 = vld [vmem:[%s332 + $0x11] sm:$0xf]
        %v464 = vld [vmem:[%s332 + $0x19] sm:$0xf]
        %v465 = vld [vmem:[%s447 + $0x1] sm:$0x1]
        %v466 = vlaneseq
        %v467 = vshrl.u32 %v466, 7
        %v468 = vsub.s32 0, %v467
        %v469 = vrot.slane %v465, %v468
        %v470 = vmul.f32 %v461, %v469
        %v471 = vmul.f32 %v462, %v469
        %v472 = vmul.f32 %v463, %v469
        %v473 = vmul.f32 %v464, %v469
        %v474 = vadd.f32 %v457, %v470
        %v475 = vadd.f32 %v458, %v471
        %v476 = vadd.f32 %v459, %v472
        %v477 = vadd.f32 %v460, %v473
        %v478 = vld [vmem:[%s332 + $0x2] sm:$0xf]
        %v479 = vld [vmem:[%s332 + $0xa] sm:$0xf]
        %v480 = vld [vmem:[%s332 + $0x12] sm:$0xf]
        %v481 = vld [vmem:[%s332 + $0x1a] sm:$0xf]
        %v482 = vld [vmem:[%s447 + $0x2] sm:$0x1]
        %v483 = vlaneseq
        %v484 = vshrl.u32 %v483, 7
        %v485 = vsub.s32 0, %v484
        %v486 = vrot.slane %v482, %v485
        %v487 = vmul.f32 %v478, %v486
        %v488 = vmul.f32 %v479, %v486
        %v489 = vmul.f32 %v480, %v486
        %v490 = vmul.f32 %v481, %v486
        %v491 = vadd.f32 %v474, %v487
        %v492 = vadd.f32 %v475, %v488
        %v493 = vadd.f32 %v476, %v489
        %v494 = vadd.f32 %v477, %v490
        %v495 = vld [vmem:[%s3] sm:$0x1]
        %v497 = vlaneseq
        %v498 = vshrl.u32 %v497, 7
        %v499 = vsub.s32 0, %v498
        %v500 = vrot.slane %v495, %v499
        %v502 = vadd.f32 %v491, %v500
        %v503 = vadd.f32 %v492, %v500
        %v504 = vadd.f32 %v493, %v500
        %v505 = vadd.f32 %v494, %v500
        %506 = vst.msk [vmem:[#allocation3] sm:$0xf] %vm329, %v502
        %507 = vst.msk [vmem:[#allocation3 + $0x4] sm:$0xf] %vm329, %v503
        %508 = vst.msk [vmem:[#allocation3 + $0x8] sm:$0xf] %vm329, %v504
        %509 = vst.msk [vmem:[#allocation3 + $0xc] sm:$0xf] %vm329, %v505
        %v510 = vld [vmem:[#allocation3] sm:$0xff]
        %v511 = vld [vmem:[#allocation3 + $0x8] sm:$0xff]
        %v512 = vpack.c.bf16 %v511, %v510
        %v513 = vld [vmem:[%s4] sm:$0xf]
        %v514 = vld [vmem:[%s4 + $0x4] sm:$0xf]
        %v515 = vld [vmem:[%s5] sm:$0x1]
        %v517 = vlaneseq
        %v518 = vshrl.u32 %v517, 7
        %v519 = vsub.s32 0, %v518
        %v520 = vrot.slane %v515, %v519
        %v524 = vunpack.c.l.b16 %v513
        %v525 = vunpack.c.l.b16 %v514
        %v526 = vpack.c.b16 %v525, %v524
        %v529 = vsel %vm317, %v512, 0
        %531 = vmatprep.subr.bf16.mxu0 0
        %532 = vmatpush1.bf16.msra.mxu0 %v526
        %533 = vmatprep.subr.bf16.mxu0 0
        %534 = vmatpush1.bf16.msra.mxu0 0
        %535 = vmatprep.subr.bf16.mxu0 0
        %536 = vmatpush1.bf16.msra.mxu0 0
        %537 = vmatprep.subr.bf16.mxu0 0
        %538 = vmatpush1.bf16.msra.mxu0 0
        %539 = vmatprep.subr.bf16.mxu0 0
        %540 = vmatpush1.bf16.msra.mxu0 0
        %541 = vmatprep.subr.bf16.mxu0 0
        %542 = vmatpush1.bf16.msra.mxu0 0
        %543 = vmatprep.subr.bf16.mxu0 0
        %544 = vmatpush1.bf16.msra.mxu0 0
        %545 = vmatprep.subr.bf16.mxu0 0
        %546 = vmatpush1.bf16.msra.mxu0 0
        %547 = vmatprep.subr.bf16.mxu0 0
        %548 = vmatpush1.bf16.msra.mxu0 0
        %549 = vmatprep.subr.bf16.mxu0 0
        %550 = vmatpush1.bf16.msra.mxu0 0
        %551 = vmatprep.subr.bf16.mxu0 0
        %552 = vmatpush1.bf16.msra.mxu0 0
        %553 = vmatprep.subr.bf16.mxu0 0
        %554 = vmatpush1.bf16.msra.mxu0 0
        %555 = vmatprep.subr.bf16.mxu0 0
        %556 = vmatpush1.bf16.msra.mxu0 0
        %557 = vmatprep.subr.bf16.mxu0 0
        %558 = vmatpush1.bf16.msra.mxu0 0
        %559 = vmatprep.subr.bf16.mxu0 0
        %560 = vmatpush1.bf16.msra.mxu0 0
        %561 = vmatprep.subr.bf16.mxu0 0
        %562 = vmatpush1.bf16.msra.mxu0 0
        %563 = vmatprep.mubr.bf16.mxu0 0
        %564 = vmatmul.mubr.bf16.gmra.mrb[0].mxu0 %v529
        %v565 = vpop.f32.mrb[0].mxu0
        %v566 = vadd.f32 %v520, %v565
        %v567 = vpop.f32.mrb[0].mxu0
        %v568 = vpop.f32.mrb[0].mxu0
        %v569 = vadd.f32 %v520, %v568
        %v570 = vpop.f32.mrb[0].mxu0
        %571 = vdwg.mxu0
        %v572 = vmax.f32 %v566, 0.0
        %v573 = vmax.f32 %v569, 0.0
        %576 = vrot.lane.b32.xlu0 %v572, 16
        %v577 = vpop.permute.xlu0 %576
        %578 = vrot.lane.b32.xlu0 %v573, 16
        %v579 = vpop.permute.xlu0 %578
        %v582 = vadd.f32 %v309, %v577
        %v583 = vadd.f32 %v312, %v579
        %586 = vrot.lane.b32.xlu0 %v582, 112
        %v587 = vpop.permute.xlu0 %586
        %588 = vrot.lane.b32.xlu0 %v583, 112
        %v589 = vpop.permute.xlu0 %588
        %592 = vst.msk [vmem:[%s244] sm:$0xff] %vm270, %v587
        %593 = vst.msk [vmem:[%s244 + $0x8] sm:$0xff] %vm270, %v589
        %s594 = sand.u32 %s159, 1
        %s595 = scalar_lea.sflag [#allocation5], %s594
        %s596 = sand.u32 %s159, 1
        %s597 = smul.addr %s596, 16
        %s598 = scalar_lea.vmem [#allocation4], %s597
        // Predicated region
        $region45: #{shuffle_stage_forward.3} parent=43 // pred_check
          %p599 = pneg %p169
        $region46: #{shuffle_stage_forward.3} parent=43 // pred_check_branch
          %601 = sbr.rel (%p599) target = $region48
        $region47: #{shuffle_stage_forward.3} parent=43 // pred_region
          %s603 = ssub.s32 256, 256
          %604 = vsyncadd %s595, %s603
          %s605 = smul.addr %s20, 2
          %s606 = smul.addr %s605, 128
          %s607 = scalar_lea.hbm %s6, %s606
          %s608 = sshll.u32 %s598, 4
          %s609 = int_to_ptr.vmem [resolvable:$true] %s608
          %614 = dma.vmem_to_hbm [thread:$0]  %s609, 256, %s607, %s595, 128, 128, 8
        $region48: #{shuffle_stage_forward.3} parent=43 // pred_fallthru
          _
      $region44: #{shuffle_stage_forward.3} parent=5 // pred_fallthru
        _
      %p615 = scmp.le.s32.totalorder 2, %s15
      // Predicated region
      $region49: #{shuffle_stage_forward.3} parent=5 // pred_check
        %p616 = pneg %p615
      $region50: #{shuffle_stage_forward.3} parent=5 // pred_check_branch
        %618 = sbr.rel (%p616) target = $region52
      $region51: #{shuffle_stage_forward.3} parent=5 // pred_region
        %s619 = ssub.s32 %s15, 2
        // Predicated region
        $region53: #{shuffle_stage_forward.3} parent=51 // pred_check
          %p620 = pneg %p175
        $region54: #{shuffle_stage_forward.3} parent=51 // pred_check_branch
          %622 = sbr.rel (%p620) target = $region56
        $region55: #{shuffle_stage_forward.3} parent=51 // pred_region
          %s623 = sand.u32 %s160, 1
          %s624 = scalar_lea.sflag [#allocation5], %s623
          %s625 = sand.u32 %s160, 1
          %s626 = smul.addr %s625, 16
          %s627 = scalar_lea.vmem [#allocation4], %s626
          %628 = dma.done %s624, 256
        $region56: #{shuffle_stage_forward.3} parent=51 // pred_fallthru
          _
      $region52: #{shuffle_stage_forward.3} parent=5 // pred_fallthru
        _
    $region6: #{shuffle_stage_forward.3} parent=1 // loop_footer
      %s19 = sadd.s32 1, %s15
    $region7: #{shuffle_stage_forward.3} parent=1 // loop_footer_branch
      %14 = sbr.rel target = $region3
    $region8: #{shuffle_stage_forward.3} parent=1 // loop_exit
      _
    %629 = vsyncpa [#allocation5], 1
    %s630 = scalar_lea.sflag [#allocation5], 1
    %631 = vsyncpa %s630, 1

// kernel: shuffle_stage_forward.2
$region0: #{shuffle_stage_forward.2}
  #allocation0 [shape = 'u32[]', space=smem, size = 0x4, offset = 0x4, fixed_abs, tag = 'smem constant byte address 0x4 - core index']
  #allocation1 [shape = 'u32[144,128]{1,0:T(1,128)}', space=vmem, size = 0x12000, scoped, tag = 'internal scratch']
  #allocation2 [shape = 'f32[1,2,2,5,8,16]{5,4,3,2,1,0:T(8,128)}', space=vmem, size = 0x14000, scoped, tag = 'scratch operand']
  #allocation3 [shape = 'f32[1,16,32]{2,1,0:T(8,128)}', space=vmem, size = 0x2000, scoped, tag = 'scratch operand']
  %s0 = inlined_call_operand.vmem [shape: f32[2,2,2,5,8,16], index: 0, kind: input, shape index: {}]
  %s1 = inlined_call_operand.vmem [shape: bf16[16,16], index: 1, kind: input, shape index: {}]
  %s2 = inlined_call_operand.vmem [shape: f32[3,3,16], index: 2, kind: input, shape index: {}]
  %s3 = inlined_call_operand.vmem [shape: f32[1,16], index: 3, kind: input, shape index: {}]
  %s4 = inlined_call_operand.vmem [shape: f32[3,3,16], index: 4, kind: input, shape index: {}]
  %s5 = inlined_call_operand.vmem [shape: f32[1,16], index: 5, kind: input, shape index: {}]
  %s6 = inlined_call_operand.vmem [shape: bf16[32,32], index: 6, kind: input, shape index: {}]
  %s7 = inlined_call_operand.vmem [shape: f32[1,32], index: 7, kind: input, shape index: {}]
  %s8 = inlined_call_operand.vmem [shape: f32[2,16,32], index: 8, kind: output, shape index: {}]
  %s9 = sld [smem:[#allocation0]]
  $region65: #{shuffle_stage_forward.2} parent=0
    _
  %s11 = ssub.s32 1, %s9
  %s12 = scalar_select 0, %s11, %s9
  loop: start=0, step=1, limit=4
  $region2: #{shuffle_stage_forward.2} parent=0 // loop_pre_header
    _
  $region3: #{shuffle_stage_forward.2} parent=0 // loop_header
    %s14 = sphi 0, %s18
    %p15 = scmp.ge.s32.totalorder %s14, 4
    %s24 = sphi 0, %s26
    %s27 = sphi 0, %s24
    %s28 = sphi 0, %s27
    %s44 = sphi 0, %s28
    %s48 = sphi 0, %s48
    %s50 = sphi 0, %s48
    %s51 = sphi 0, %s50
    %s65 = sphi 0, %s51
    %s69 = sphi 0, %s69
    %s71 = sphi 0, %s69
    %s72 = sphi 0, %s71
    %s86 = sphi 0, %s72
    %s90 = sphi 0, %s90
    %s92 = sphi 0, %s90
    %s93 = sphi 0, %s92
    %s107 = sphi 0, %s93
    %s111 = sphi 0, %s111
    %s113 = sphi 0, %s111
    %s114 = sphi 0, %s113
    %s128 = sphi 0, %s114
    %s132 = sphi 0, %s132
    %s134 = sphi 0, %s132
    %s135 = sphi 0, %s134
    %s149 = sphi 0, %s135
    %s153 = sphi 0, %s153
    %s155 = sphi 0, %s153
    %s156 = sphi 0, %s155
    %s170 = sphi 0, %s156
    %s174 = sphi 0, %s174
    %s176 = sphi 0, %s174
    %s177 = sphi 0, %s176
    %s191 = sphi 0, %s177
    %s197 = sphi 0, %s199
    %s200 = sphi 0, %s197
    %s201 = sphi 0, %s200
    %s217 = sphi 0, %s201
  $region4: #{shuffle_stage_forward.2} parent=0 // loop_header_branch
    %17 = sbr.rel (%p15) target = $region8
  $region5: #{shuffle_stage_forward.2} parent=0 // loop_body
    %s19 = ssub.s32 %s14, 1
    %s20 = ssub.s32 %s14, 2
    %s21 = sadd.s32 %s14, 1
    %s22 = ssub.s32 %s14, %s21
    %p23 = scmp.eq.s32.totalorder %s22, 0
    %s25 = sadd.s32 %s24, 1
    %s26 = scalar_select %p23, %s24, %s25
    %p29 = pneg %p23
    %p30 = scmp.eq.s32.totalorder %s14, 1
    %p31 = por %p29, %p30
    %p32 = scmp.ne.s32.totalorder %s24, %s27
    %p33 = scmp.eq.s32.totalorder %s14, 0
    %p34 = por %p32, %p33
    %p35 = scmp.ne.s32.totalorder %s24, %s27
    %p36 = scmp.eq.s32.totalorder %s19, 1
    %p37 = por %p35, %p36
    %p38 = scmp.ne.s32.totalorder %s27, %s28
    %p39 = scmp.eq.s32.totalorder %s19, 0
    %p40 = por %p38, %p39
    %p41 = scmp.ne.s32.totalorder %s27, %s28
    %p42 = scmp.eq.s32.totalorder %s20, 1
    %p43 = por %p41, %p42
    %p45 = scmp.ne.s32.totalorder %s28, %s44
    %p46 = scmp.eq.s32.totalorder %s20, 0
    %p47 = por %p45, %p46
    %s49 = sadd.s32 %s48, 1
    %p52 = scmp.eq.s32.totalorder %s14, 1
    %p53 = scmp.ne.s32.totalorder %s48, %s50
    %p54 = scmp.eq.s32.totalorder %s14, 0
    %p55 = por %p53, %p54
    %p56 = scmp.ne.s32.totalorder %s48, %s50
    %p57 = scmp.eq.s32.totalorder %s19, 1
    %p58 = por %p56, %p57
    %p59 = scmp.ne.s32.totalorder %s50, %s51
    %p60 = scmp.eq.s32.totalorder %s19, 0
    %p61 = por %p59, %p60
    %p62 = scmp.ne.s32.totalorder %s50, %s51
    %p63 = scmp.eq.s32.totalorder %s20, 1
    %p64 = por %p62, %p63
    %p66 = scmp.ne.s32.totalorder %s51, %s65
    %p67 = scmp.eq.s32.totalorder %s20, 0
    %p68 = por %p66, %p67
    %s70 = sadd.s32 %s69, 1
    %p73 = scmp.eq.s32.totalorder %s14, 1
    %p74 = scmp.ne.s32.totalorder %s69, %s71
    %p75 = scmp.eq.s32.totalorder %s14, 0
    %p76 = por %p74, %p75
    %p77 = scmp.ne.s32.totalorder %s69, %s71
    %p78 = scmp.eq.s32.totalorder %s19, 1
    %p79 = por %p77, %p78
    %p80 = scmp.ne.s32.totalorder %s71, %s72
    %p81 = scmp.eq.s32.totalorder %s19, 0
    %p82 = por %p80, %p81
    %p83 = scmp.ne.s32.totalorder %s71, %s72
    %p84 = scmp.eq.s32.totalorder %s20, 1
    %p85 = por %p83, %p84
    %p87 = scmp.ne.s32.totalorder %s72, %s86
    %p88 = scmp.eq.s32.totalorder %s20, 0
    %p89 = por %p87, %p88
    %s91 = sadd.s32 %s90, 1
    %p94 = scmp.eq.s32.totalorder %s14, 1
    %p95 = scmp.ne.s32.totalorder %s90, %s92
    %p96 = scmp.eq.s32.totalorder %s14, 0
    %p97 = por %p95, %p96
    %p98 = scmp.ne.s32.totalorder %s90, %s92
    %p99 = scmp.eq.s32.totalorder %s19, 1
    %p100 = por %p98, %p99
    %p101 = scmp.ne.s32.totalorder %s92, %s93
    %p102 = scmp.eq.s32.totalorder %s19, 0
    %p103 = por %p101, %p102
    %p104 = scmp.ne.s32.totalorder %s92, %s93
    %p105 = scmp.eq.s32.totalorder %s20, 1
    %p106 = por %p104, %p105
    %p108 = scmp.ne.s32.totalorder %s93, %s107
    %p109 = scmp.eq.s32.totalorder %s20, 0
    %p110 = por %p108, %p109
    %s112 = sadd.s32 %s111, 1
    %p115 = scmp.eq.s32.totalorder %s14, 1
    %p116 = scmp.ne.s32.totalorder %s111, %s113
    %p117 = scmp.eq.s32.totalorder %s14, 0
    %p118 = por %p116, %p117
    %p119 = scmp.ne.s32.totalorder %s111, %s113
    %p120 = scmp.eq.s32.totalorder %s19, 1
    %p121 = por %p119, %p120
    %p122 = scmp.ne.s32.totalorder %s113, %s114
    %p123 = scmp.eq.s32.totalorder %s19, 0
    %p124 = por %p122, %p123
    %p125 = scmp.ne.s32.totalorder %s113, %s114
    %p126 = scmp.eq.s32.totalorder %s20, 1
    %p127 = por %p125, %p126
    %p129 = scmp.ne.s32.totalorder %s114, %s128
    %p130 = scmp.eq.s32.totalorder %s20, 0
    %p131 = por %p129, %p130
    %s133 = sadd.s32 %s132, 1
    %p136 = scmp.eq.s32.totalorder %s14, 1
    %p137 = scmp.ne.s32.totalorder %s132, %s134
    %p138 = scmp.eq.s32.totalorder %s14, 0
    %p139 = por %p137, %p138
    %p140 = scmp.ne.s32.totalorder %s132, %s134
    %p141 = scmp.eq.s32.totalorder %s19, 1
    %p142 = por %p140, %p141
    %p143 = scmp.ne.s32.totalorder %s134, %s135
    %p144 = scmp.eq.s32.totalorder %s19, 0
    %p145 = por %p143, %p144
    %p146 = scmp.ne.s32.totalorder %s134, %s135
    %p147 = scmp.eq.s32.totalorder %s20, 1
    %p148 = por %p146, %p147
    %p150 = scmp.ne.s32.totalorder %s135, %s149
    %p151 = scmp.eq.s32.totalorder %s20, 0
    %p152 = por %p150, %p151
    %s154 = sadd.s32 %s153, 1
    %p157 = scmp.eq.s32.totalorder %s14, 1
    %p158 = scmp.ne.s32.totalorder %s153, %s155
    %p159 = scmp.eq.s32.totalorder %s14, 0
    %p160 = por %p158, %p159
    %p161 = scmp.ne.s32.totalorder %s153, %s155
    %p162 = scmp.eq.s32.totalorder %s19, 1
    %p163 = por %p161, %p162
    %p164 = scmp.ne.s32.totalorder %s155, %s156
    %p165 = scmp.eq.s32.totalorder %s19, 0
    %p166 = por %p164, %p165
    %p167 = scmp.ne.s32.totalorder %s155, %s156
    %p168 = scmp.eq.s32.totalorder %s20, 1
    %p169 = por %p167, %p168
    %p171 = scmp.ne.s32.totalorder %s156, %s170
    %p172 = scmp.eq.s32.totalorder %s20, 0
    %p173 = por %p171, %p172
    %s175 = sadd.s32 %s174, 1
    %p178 = scmp.eq.s32.totalorder %s14, 1
    %p179 = scmp.ne.s32.totalorder %s174, %s176
    %p180 = scmp.eq.s32.totalorder %s14, 0
    %p181 = por %p179, %p180
    %p182 = scmp.ne.s32.totalorder %s174, %s176
    %p183 = scmp.eq.s32.totalorder %s19, 1
    %p184 = por %p182, %p183
    %p185 = scmp.ne.s32.totalorder %s176, %s177
    %p186 = scmp.eq.s32.totalorder %s19, 0
    %p187 = por %p185, %p186
    %p188 = scmp.ne.s32.totalorder %s176, %s177
    %p189 = scmp.eq.s32.totalorder %s20, 1
    %p190 = por %p188, %p189
    %p192 = scmp.ne.s32.totalorder %s177, %s191
    %p193 = scmp.eq.s32.totalorder %s20, 0
    %p194 = por %p192, %p193
    %s195 = ssub.s32 %s14, %s21
    %p196 = scmp.eq.s32.totalorder %s195, 0
    %s198 = sadd.s32 %s197, 1
    %s199 = scalar_select %p196, %s197, %s198
    %p202 = pneg %p196
    %p203 = scmp.eq.s32.totalorder %s14, 1
    %p204 = por %p202, %p203
    %p205 = scmp.ne.s32.totalorder %s197, %s200
    %p206 = scmp.eq.s32.totalorder %s14, 0
    %p207 = por %p205, %p206
    %p208 = scmp.ne.s32.totalorder %s197, %s200
    %p209 = scmp.eq.s32.totalorder %s19, 1
    %p210 = por %p208, %p209
    %p211 = scmp.ne.s32.totalorder %s200, %s201
    %p212 = scmp.eq.s32.totalorder %s19, 0
    %p213 = por %p211, %p212
    %p214 = scmp.ne.s32.totalorder %s200, %s201
    %p215 = scmp.eq.s32.totalorder %s20, 1
    %p216 = por %p214, %p215
    %p218 = scmp.ne.s32.totalorder %s201, %s217
    %p219 = scmp.eq.s32.totalorder %s20, 0
    %p220 = por %p218, %p219
    %p221 = scmp.le.s32.totalorder 1, %s14
    %p222 = scmp.lt.s32.totalorder %s14, 3
    %p223 = pnand %p221, %p222
    %p224 = pneg %p223
    // Predicated region
    $region9: #{shuffle_stage_forward.2} parent=5 // pred_check
      _
    $region10: #{shuffle_stage_forward.2} parent=5 // pred_check_branch
      %226 = sbr.rel (%p223) target = $region12
    $region11: #{shuffle_stage_forward.2} parent=5 // pred_region
      %s227 = ssub.s32 %s14, 1
      // Predicated region
      $region13: #{shuffle_stage_forward.2} parent=11 // pred_check
        %p228 = pneg %p61
      $region14: #{shuffle_stage_forward.2} parent=11 // pred_check_branch
        %230 = sbr.rel (%p228) target = $region16
      $region15: #{shuffle_stage_forward.2} parent=11 // pred_region
        _
      $region16: #{shuffle_stage_forward.2} parent=11 // pred_fallthru
        _
      // Predicated region
      $region17: #{shuffle_stage_forward.2} parent=11 // pred_check
        %p231 = pneg %p82
      $region18: #{shuffle_stage_forward.2} parent=11 // pred_check_branch
        %233 = sbr.rel (%p231) target = $region20
      $region19: #{shuffle_stage_forward.2} parent=11 // pred_region
        _
      $region20: #{shuffle_stage_forward.2} parent=11 // pred_fallthru
        _
      // Predicated region
      $region21: #{shuffle_stage_forward.2} parent=11 // pred_check
        %p234 = pneg %p103
      $region22: #{shuffle_stage_forward.2} parent=11 // pred_check_branch
        %236 = sbr.rel (%p234) target = $region24
      $region23: #{shuffle_stage_forward.2} parent=11 // pred_region
        _
      $region24: #{shuffle_stage_forward.2} parent=11 // pred_fallthru
        _
      // Predicated region
      $region25: #{shuffle_stage_forward.2} parent=11 // pred_check
        %p237 = pneg %p124
      $region26: #{shuffle_stage_forward.2} parent=11 // pred_check_branch
        %239 = sbr.rel (%p237) target = $region28
      $region27: #{shuffle_stage_forward.2} parent=11 // pred_region
        _
      $region28: #{shuffle_stage_forward.2} parent=11 // pred_fallthru
        _
      // Predicated region
      $region29: #{shuffle_stage_forward.2} parent=11 // pred_check
        %p240 = pneg %p145
      $region30: #{shuffle_stage_forward.2} parent=11 // pred_check_branch
        %242 = sbr.rel (%p240) target = $region32
      $region31: #{shuffle_stage_forward.2} parent=11 // pred_region
        _
      $region32: #{shuffle_stage_forward.2} parent=11 // pred_fallthru
        _
      // Predicated region
      $region33: #{shuffle_stage_forward.2} parent=11 // pred_check
        %p243 = pneg %p166
      $region34: #{shuffle_stage_forward.2} parent=11 // pred_check_branch
        %245 = sbr.rel (%p243) target = $region36
      $region35: #{shuffle_stage_forward.2} parent=11 // pred_region
        _
      $region36: #{shuffle_stage_forward.2} parent=11 // pred_fallthru
        _
      // Predicated region
      $region37: #{shuffle_stage_forward.2} parent=11 // pred_check
        %p246 = pneg %p187
      $region38: #{shuffle_stage_forward.2} parent=11 // pred_check_branch
        %248 = sbr.rel (%p246) target = $region40
      $region39: #{shuffle_stage_forward.2} parent=11 // pred_region
        _
      $region40: #{shuffle_stage_forward.2} parent=11 // pred_fallthru
        _
    $region12: #{shuffle_stage_forward.2} parent=5 // pred_fallthru
      _
    %p249 = scmp.lt.s32.totalorder %s14, 2
    // Predicated region
    $region41: #{shuffle_stage_forward.2} parent=5 // pred_check
      %p250 = pneg %p249
    $region42: #{shuffle_stage_forward.2} parent=5 // pred_check_branch
      %252 = sbr.rel (%p250) target = $region44
    $region43: #{shuffle_stage_forward.2} parent=5 // pred_region
      // Predicated region
      $region45: #{shuffle_stage_forward.2} parent=43 // pred_check
        %p253 = pneg %p34
      $region46: #{shuffle_stage_forward.2} parent=43 // pred_check_branch
        %255 = sbr.rel (%p253) target = $region48
      $region47: #{shuffle_stage_forward.2} parent=43 // pred_region
        %p256 = scmp.lt.s32.totalorder %s14, 1
        %s257 = scalar_select %p256, %s14, 1
        %s258 = smul.addr %s257, 20
        %s259 = smul.addr %s258, 8
        %s260 = scalar_lea.vmem %s0, %s259
      $region48: #{shuffle_stage_forward.2} parent=43 // pred_fallthru
        _
    $region44: #{shuffle_stage_forward.2} parent=5 // pred_fallthru
      _
    %p261 = scmp.le.s32.totalorder 1, %s14
    %p262 = scmp.lt.s32.totalorder %s14, 3
    %p263 = pnand %p261, %p262
    %p264 = pneg %p263
    // Predicated region
    $region49: #{shuffle_stage_forward.2} parent=5 // pred_check
      _
    $region50: #{shuffle_stage_forward.2} parent=5 // pred_check_branch
      %266 = sbr.rel (%p263) target = $region52
    $region51: #{shuffle_stage_forward.2} parent=5 // pred_region
      %s267 = ssub.s32 %s14, 1
      %p268 = scmp.lt.s32.totalorder %s19, 1
      %s269 = scalar_select %p268, %s19, 1
      %s270 = smul.addr %s269, 20
      %s271 = smul.addr %s270, 8
      %s272 = scalar_lea.vmem %s0, %s271
      %p273 = pneg %p40
      %p274 = pneg %p37
      %p275 = pneg %p61
      %p276 = pneg %p58
      %p277 = pneg %p82
      %p278 = pneg %p79
      %p279 = pneg %p103
      %p280 = pneg %p100
      %p281 = pneg %p124
      %p282 = pneg %p121
      %p283 = pneg %p145
      %p284 = pneg %p142
      %p285 = pneg %p166
      %p286 = pneg %p163
      %p287 = pneg %p187
      %p288 = pneg %p184
      %p289 = pneg %p213
      %p290 = pneg %p210
      %p291 = scmp.lt.s32.totalorder %s19, 1
      %s292 = scalar_select %p291, %s19, 1
      %s293 = smul.addr %s292, 2
      %s294 = smul.addr %s293, 8
      %s295 = scalar_lea.vmem %s8, %s294
      %p296 = scmp.lt.s32.totalorder %s19, 1
      %s297 = scalar_select %p296, %s19, 1
      %s298 = smul.addr %s297, 20
      %s299 = smul.addr %s298, 8
      %s300 = scalar_lea.vmem %s0, %s299
      %p301 = scmp.lt.s32.totalorder %s19, 1
      %s302 = scalar_select %p301, %s19, 1
      %s303 = smul.addr %s302, 2
      %s304 = smul.addr %s303, 8
      %s305 = scalar_lea.vmem %s8, %s304
      %v307 = vld [vmem:[%s300] sm:$0xff]
      %v308 = vld [vmem:[%s300 + $0x8] sm:$0xff]
      %v309 = vld [vmem:[%s300 + $0x10] sm:$0xff]
      %v310 = vld [vmem:[%s300 + $0x18] sm:$0xff]
      %v311 = vld [vmem:[%s300 + $0x20] sm:$0xff]
      %v312 = vld [vmem:[%s300 + $0x28] sm:$0xff]
      %v313 = vld [vmem:[%s300 + $0x30] sm:$0xff]
      %v314 = vld [vmem:[%s300 + $0x38] sm:$0xff]
      %v315 = vld [vmem:[%s300 + $0x40] sm:$0xff]
      %v316 = vld [vmem:[%s300 + $0x48] sm:$0xff]
      %v317 = vld [vmem:[%s300 + $0x50] sm:$0xff]
      %v318 = vld [vmem:[%s300 + $0x58] sm:$0xff]
      %v319 = vld [vmem:[%s300 + $0x60] sm:$0xff]
      %v320 = vld [vmem:[%s300 + $0x68] sm:$0xff]
      %v321 = vld [vmem:[%s300 + $0x70] sm:$0xff]
      %v322 = vld [vmem:[%s300 + $0x78] sm:$0xff]
      %v323 = vld [vmem:[%s300 + $0x80] sm:$0xff]
      %v324 = vld [vmem:[%s300 + $0x88] sm:$0xff]
      %v325 = vld [vmem:[%s300 + $0x90] sm:$0xff]
      %v326 = vld [vmem:[%s300 + $0x98] sm:$0xff]
      %v327 = vpack.c.bf16 %v308, %v307
      %v328 = vpack.c.bf16 %v310, %v309
      %v329 = vpack.c.bf16 %v312, %v311
      %v330 = vpack.c.bf16 %v314, %v313
      %v331 = vpack.c.bf16 %v316, %v315
      %v332 = vpack.c.bf16 %v318, %v317
      %v333 = vpack.c.bf16 %v320, %v319
      %v334 = vpack.c.bf16 %v322, %v321
      %v335 = vpack.c.bf16 %v324, %v323
      %v336 = vpack.c.bf16 %v326, %v325
      %v337 = vld [vmem:[%s1] sm:$0xf]
      %v338 = vld [vmem:[%s1 + $0x4] sm:$0xf]
      %v341 = vunpack.c.l.b16 %v337
      %v342 = vunpack.c.l.b16 %v338
      %v343 = vpack.c.b16 %v342, %v341
      %vm345 = vcmask 130048
      %v347 = vsel %vm345, %v327, 0
      %v350 = vsel %vm345, %v328, 0
      %v353 = vsel %vm345, %v329, 0
      %v356 = vsel %vm345, %v330, 0
      %v359 = vsel %vm345, %v331, 0
      %v362 = vsel %vm345, %v332, 0
      %v365 = vsel %vm345, %v333, 0
      %v368 = vsel %vm345, %v334, 0
      %v371 = vsel %vm345, %v335, 0
      %v374 = vsel %vm345, %v336, 0
      %376 = vmatprep.subr.bf16.mxu0 0
      %377 = vmatpush1.bf16.msra.mxu0 %v343
      %378 = vmatprep.subr.bf16.mxu0 0
      %379 = vmatpush1.bf16.msra.mxu0 0
      %380 = vmatprep.subr.bf16.mxu0 0
      %381 = vmatpush1.bf16.msra.mxu0 0
      %382 = vmatprep.subr.bf16.mxu0 0
      %383 = vmatpush1.bf16.msra.mxu0 0
      %384 = vmatprep.subr.bf16.mxu0 0
      %385 = vmatpush1.bf16.msra.mxu0 0
      %386 = vmatprep.subr.bf16.mxu0 0
      %387 = vmatpush1.bf16.msra.mxu0 0
      %388 = vmatprep.subr.bf16.mxu0 0
      %389 = vmatpush1.bf16.msra.mxu0 0
      %390 = vmatprep.subr.bf16.mxu0 0
      %391 = vmatpush1.bf16.msra.mxu0 0
      %392 = vmatprep.subr.bf16.mxu0 0
      %393 = vmatpush1.bf16.msra.mxu0 0
      %394 = vmatprep.subr.bf16.mxu0 0
      %395 = vmatpush1.bf16.msra.mxu0 0
      %396 = vmatprep.subr.bf16.mxu0 0
      %397 = vmatpush1.bf16.msra.mxu0 0
      %398 = vmatprep.subr.bf16.mxu0 0
      %399 = vmatpush1.bf16.msra.mxu0 0
      %400 = vmatprep.subr.bf16.mxu0 0
      %401 = vmatpush1.bf16.msra.mxu0 0
      %402 = vmatprep.subr.bf16.mxu0 0
      %403 = vmatpush1.bf16.msra.mxu0 0
      %404 = vmatprep.subr.bf16.mxu0 0
      %405 = vmatpush1.bf16.msra.mxu0 0
      %406 = vmatprep.subr.bf16.mxu0 0
      %407 = vmatpush1.bf16.msra.mxu0 0
      %408 = vmatprep.mubr.bf16.mxu0 0
      %409 = vmatmul.mubr.bf16.gmra.mrb[0].mxu0 %v347
      %v410 = vpop.f32.mrb[0].mxu0
      %v411 = vadd.f32 0.0, %v410
      %v412 = vpop.f32.mrb[0].mxu0
      %v413 = vpop.f32.mrb[0].mxu0
      %v414 = vadd.f32 0.0, %v413
      %v415 = vpop.f32.mrb[0].mxu0
      %416 = vmatprep.mubr.bf16.mxu0 0
      %417 = vmatmul.mubr.bf16.gmra.mrb[0].mxu0 %v350
      %v418 = vpop.f32.mrb[0].mxu0
      %v419 = vadd.f32 0.0, %v418
      %v420 = vpop.f32.mrb[0].mxu0
      %v421 = vpop.f32.mrb[0].mxu0
      %v422 = vadd.f32 0.0, %v421
      %v423 = vpop.f32.mrb[0].mxu0
      %424 = vmatprep.mubr.bf16.mxu0 0
      %425 = vmatmul.mubr.bf16.gmra.mrb[0].mxu0 %v353
      %v426 = vpop.f32.mrb[0].mxu0
      %v427 = vadd.f32 0.0, %v426
      %v428 = vpop.f32.mrb[0].mxu0
      %v429 = vpop.f32.mrb[0].mxu0
      %v430 = vadd.f32 0.0, %v429
      %v431 = vpop.f32.mrb[0].mxu0
      %432 = vmatprep.mubr.bf16.mxu0 0
      %433 = vmatmul.mubr.bf16.gmra.mrb[0].mxu0 %v356
      %v434 = vpop.f32.mrb[0].mxu0
      %v435 = vadd.f32 0.0, %v434
      %v436 = vpop.f32.mrb[0].mxu0
      %v437 = vpop.f32.mrb[0].mxu0
      %v438 = vadd.f32 0.0, %v437
      %v439 = vpop.f32.mrb[0].mxu0
      %440 = vmatprep.mubr.bf16.mxu0 0
      %441 = vmatmul.mubr.bf16.gmra.mrb[0].mxu0 %v359
      %v442 = vpop.f32.mrb[0].mxu0
      %v443 = vadd.f32 0.0, %v442
      %v444 = vpop.f32.mrb[0].mxu0
      %v445 = vpop.f32.mrb[0].mxu0
      %v446 = vadd.f32 0.0, %v445
      %v447 = vpop.f32.mrb[0].mxu0
      %448 = vmatprep.mubr.bf16.mxu0 0
      %449 = vmatmul.mubr.bf16.gmra.mrb[0].mxu0 %v362
      %v450 = vpop.f32.mrb[0].mxu0
      %v451 = vadd.f32 0.0, %v450
      %v452 = vpop.f32.mrb[0].mxu0
      %v453 = vpop.f32.mrb[0].mxu0
      %v454 = vadd.f32 0.0, %v453
      %v455 = vpop.f32.mrb[0].mxu0
      %456 = vmatprep.mubr.bf16.mxu0 0
      %457 = vmatmul.mubr.bf16.gmra.mrb[0].mxu0 %v365
      %v458 = vpop.f32.mrb[0].mxu0
      %v459 = vadd.f32 0.0, %v458
      %v460 = vpop.f32.mrb[0].mxu0
      %v461 = vpop.f32.mrb[0].mxu0
      %v462 = vadd.f32 0.0, %v461
      %v463 = vpop.f32.mrb[0].mxu0
      %464 = vmatprep.mubr.bf16.mxu0 0
      %465 = vmatmul.mubr.bf16.gmra.mrb[0].mxu0 %v368
      %v466 = vpop.f32.mrb[0].mxu0
      %v467 = vadd.f32 0.0, %v466
      %v468 = vpop.f32.mrb[0].mxu0
      %v469 = vpop.f32.mrb[0].mxu0
      %v470 = vadd.f32 0.0, %v469
      %v471 = vpop.f32.mrb[0].mxu0
      %472 = vmatprep.mubr.bf16.mxu0 0
      %473 = vmatmul.mubr.bf16.gmra.mrb[0].mxu0 %v371
      %v474 = vpop.f32.mrb[0].mxu0
      %v475 = vadd.f32 0.0, %v474
      %v476 = vpop.f32.mrb[0].mxu0
      %v477 = vpop.f32.mrb[0].mxu0
      %v478 = vadd.f32 0.0, %v477
      %v479 = vpop.f32.mrb[0].mxu0
      %480 = vmatprep.mubr.bf16.mxu0 0
      %481 = vmatmul.mubr.bf16.gmra.mrb[0].mxu0 %v374
      %v482 = vpop.f32.mrb[0].mxu0
      %v483 = vadd.f32 0.0, %v482
      %v484 = vpop.f32.mrb[0].mxu0
      %v485 = vpop.f32.mrb[0].mxu0
      %v486 = vadd.f32 0.0, %v485
      %v487 = vpop.f32.mrb[0].mxu0
      %488 = vdwg.mxu0
      %v489 = vmax.f32 %v411, 0.0
      %v490 = vmax.f32 %v414, 0.0
      %v491 = vmax.f32 %v419, 0.0
      %v492 = vmax.f32 %v422, 0.0
      %v493 = vmax.f32 %v427, 0.0
      %v494 = vmax.f32 %v430, 0.0
      %v495 = vmax.f32 %v435, 0.0
      %v496 = vmax.f32 %v438, 0.0
      %v497 = vmax.f32 %v443, 0.0
      %v498 = vmax.f32 %v446, 0.0
      %v499 = vmax.f32 %v451, 0.0
      %v500 = vmax.f32 %v454, 0.0
      %v501 = vmax.f32 %v459, 0.0
      %v502 = vmax.f32 %v462, 0.0
      %v503 = vmax.f32 %v467, 0.0
      %v504 = vmax.f32 %v470, 0.0
      %v505 = vmax.f32 %v475, 0.0
      %v506 = vmax.f32 %v478, 0.0
      %v507 = vmax.f32 %v483, 0.0
      %v508 = vmax.f32 %v486, 0.0
      %509 = vst.msk [vmem:[#allocation2] sm:$0xff] %vm345, %v489
      %510 = vst.msk [vmem:[#allocation2 + $0x8] sm:$0xff] %vm345, %v490
      %511 = vst.msk [vmem:[#allocation2 + $0x10] sm:$0xff] %vm345, %v491
      %512 = vst.msk [vmem:[#allocation2 + $0x18] sm:$0xff] %vm345, %v492
      %513 = vst.msk [vmem:[#allocation2 + $0x20] sm:$0xff] %vm345, %v493
      %514 = vst.msk [vmem:[#allocation2 + $0x28] sm:$0xff] %vm345, %v494
      %515 = vst.msk [vmem:[#allocation2 + $0x30] sm:$0xff] %vm345, %v495
      %516 = vst.msk [vmem:[#allocation2 + $0x38] sm:$0xff] %vm345, %v496
      %517 = vst.msk [vmem:[#allocation2 + $0x40] sm:$0xff] %vm345, %v497
      %518 = vst.msk [vmem:[#allocation2 + $0x48] sm:$0xff] %vm345, %v498
      %519 = vst.msk [vmem:[#allocation2 + $0x50] sm:$0xff] %vm345, %v499
      %520 = vst.msk [vmem:[#allocation2 + $0x58] sm:$0xff] %vm345, %v500
      %521 = vst.msk [vmem:[#allocation2 + $0x60] sm:$0xff] %vm345, %v501
      %522 = vst.msk [vmem:[#allocation2 + $0x68] sm:$0xff] %vm345, %v502
      %523 = vst.msk [vmem:[#allocation2 + $0x70] sm:$0xff] %vm345, %v503
      %524 = vst.msk [vmem:[#allocation2 + $0x78] sm:$0xff] %vm345, %v504
      %525 = vst.msk [vmem:[#allocation2 + $0x80] sm:$0xff] %vm345, %v505
      %526 = vst.msk [vmem:[#allocation2 + $0x88] sm:$0xff] %vm345, %v506
      %527 = vst.msk [vmem:[#allocation2 + $0x90] sm:$0xff] %vm345, %v507
      %528 = vst.msk [vmem:[#allocation2 + $0x98] sm:$0xff] %vm345, %v508
      %v529 = vld [vmem:[#allocation2] sm:$0xf]
      %v530 = vld [vmem:[#allocation2 + $0x8] sm:$0xf]
      %v531 = vld [vmem:[#allocation2 + $0x10] sm:$0xf]
      %v532 = vld [vmem:[#allocation2 + $0x18] sm:$0xf]
      %v533 = vld [vmem:[%s2] sm:$0x1]
      %v534 = vlaneseq
      %v535 = vshrl.u32 %v534, 7
      %v536 = vsub.s32 0, %v535
      %v537 = vrot.slane %v533, %v536
      %v538 = vmul.f32 %v529, %v537
      %v539 = vmul.f32 %v530, %v537
      %v540 = vmul.f32 %v531, %v537
      %v541 = vmul.f32 %v532, %v537
      %v542 = vadd.f32 %v538, 0.0
      %v543 = vadd.f32 %v539, 0.0
      %v544 = vadd.f32 %v540, 0.0
      %v545 = vadd.f32 %v541, 0.0
      %v546 = vld [vmem:[%s300] sm:$0xf]
      %v547 = vld [vmem:[%s300 + $0x8] sm:$0xf]
      %v548 = vld [vmem:[%s300 + $0x10] sm:$0xf]
      %v549 = vld [vmem:[%s300 + $0x18] sm:$0xf]
      %v550 = vld [vmem:[%s4] sm:$0x1]
      %v551 = vlaneseq
      %v552 = vshrl.u32 %v551, 7
      %v553 = vsub.s32 0, %v552
      %v554 = vrot.slane %v550, %v553
      %v555 = vmul.f32 %v546, %v554
      %v556 = vmul.f32 %v547, %v554
      %v557 = vmul.f32 %v548, %v554
      %v558 = vmul.f32 %v549, %v554
      %v559 = vadd.f32 %v555, 0.0
      %v560 = vadd.f32 %v556, 0.0
      %v561 = vadd.f32 %v557, 0.0
      %v562 = vadd.f32 %v558, 0.0
      %s563 = scalar_lea.vmem [#allocation2], 40
      %v564 = vld [vmem:[%s563] sm:$0xf]
      %v565 = vld [vmem:[%s563 + $0x8] sm:$0xf]
      %v566 = vld [vmem:[%s563 + $0x10] sm:$0xf]
      %v567 = vld [vmem:[%s563 + $0x18] sm:$0xf]
      %v568 = vld [vmem:[%s2 + $0x1] sm:$0x1]
      %v569 = vlaneseq
      %v570 = vshrl.u32 %v569, 7
      %v571 = vsub.s32 0, %v570
      %v572 = vrot.slane %v568, %v571
      %v573 = vmul.f32 %v564, %v572
      %v574 = vmul.f32 %v565, %v572
      %v575 = vmul.f32 %v566, %v572
      %v576 = vmul.f32 %v567, %v572
      %v577 = vadd.f32 %v542, %v573
      %v578 = vadd.f32 %v543, %v574
      %v579 = vadd.f32 %v544, %v575
      %v580 = vadd.f32 %v545, %v576
      %s581 = scalar_lea.vmem %s300, 40
      %v582 = vld [vmem:[%s581] sm:$0xf]
      %v583 = vld [vmem:[%s581 + $0x8] sm:$0xf]
      %v584 = vld [vmem:[%s581 + $0x10] sm:$0xf]
      %v585 = vld [vmem:[%s581 + $0x18] sm:$0xf]
      %v586 = vld [vmem:[%s4 + $0x1] sm:$0x1]
      %v587 = vlaneseq
      %v588 = vshrl.u32 %v587, 7
      %v589 = vsub.s32 0, %v588
      %v590 = vrot.slane %v586, %v589
      %v591 = vmul.f32 %v582, %v590
      %v592 = vmul.f32 %v583, %v590
      %v593 = vmul.f32 %v584, %v590
      %v594 = vmul.f32 %v585, %v590
      %v595 = vadd.f32 %v559, %v591
      %v596 = vadd.f32 %v560, %v592
      %v597 = vadd.f32 %v561, %v593
      %v598 = vadd.f32 %v562, %v594
      %v599 = vld [vmem:[#allocation2 + $0x1] sm:$0xf]
      %v600 = vld [vmem:[#allocation2 + $0x9] sm:$0xf]
      %v601 = vld [vmem:[#allocation2 + $0x11] sm:$0xf]
      %v602 = vld [vmem:[#allocation2 + $0x19] sm:$0xf]
      %v603 = vld [vmem:[%s2 + $0x2] sm:$0x1]
      %v604 = vlaneseq
      %v605 = vshrl.u32 %v604, 7
      %v606 = vsub.s32 0, %v605
      %v607 = vrot.slane %v603, %v606
      %v608 = vmul.f32 %v599, %v607
      %v609 = vmul.f32 %v600, %v607
      %v610 = vmul.f32 %v601, %v607
      %v611 = vmul.f32 %v602, %v607
      %v612 = vadd.f32 %v577, %v608
      %v613 = vadd.f32 %v578, %v609
      %v614 = vadd.f32 %v579, %v610
      %v615 = vadd.f32 %v580, %v611
      %v616 = vld [vmem:[%s300 + $0x1] sm:$0xf]
      %v617 = vld [vmem:[%s300 + $0x9] sm:$0xf]
      %v618 = vld [vmem:[%s300 + $0x11] sm:$0xf]
      %v619 = vld [vmem:[%s300 + $0x19] sm:$0xf]
      %v620 = vld [vmem:[%s4 + $0x2] sm:$0x1]
      %v621 = vlaneseq
      %v622 = vshrl.u32 %v621, 7
      %v623 = vsub.s32 0, %v622
      %v624 = vrot.slane %v620, %v623
      %v625 = vmul.f32 %v616, %v624
      %v626 = vmul.f32 %v617, %v624
      %v627 = vmul.f32 %v618, %v624
      %v628 = vmul.f32 %v619, %v624
      %v629 = vadd.f32 %v595, %v625
      %v630 = vadd.f32 %v596, %v626
      %v631 = vadd.f32 %v597, %v627
      %v632 = vadd.f32 %v598, %v628
      %s633 = scalar_lea.vmem [#allocation2], 80
      %v634 = vld [vmem:[%s633] sm:$0xf]
      %v635 = vld [vmem:[%s633 + $0x8] sm:$0xf]
      %v636 = vld [vmem:[%s633 + $0x10] sm:$0xf]
      %v637 = vld [vmem:[%s633 + $0x18] sm:$0xf]
      %s638 = scalar_lea.vmem %s2, 4
      %v639 = vld [vmem:[%s638] sm:$0x1]
      %v640 = vlaneseq
      %v641 = vshrl.u32 %v640, 7
      %v642 = vsub.s32 0, %v641
      %v643 = vrot.slane %v639, %v642
      %v644 = vmul.f32 %v634, %v643
      %v645 = vmul.f32 %v635, %v643
      %v646 = vmul.f32 %v636, %v643
      %v647 = vmul.f32 %v637, %v643
      %v648 = vadd.f32 %v612, %v644
      %v649 = vadd.f32 %v613, %v645
      %v650 = vadd.f32 %v614, %v646
      %v651 = vadd.f32 %v615, %v647
      %s652 = scalar_lea.vmem %s300, 80
      %v653 = vld [vmem:[%s652] sm:$0xf]
      %v654 = vld [vmem:[%s652 + $0x8] sm:$0xf]
      %v655 = vld [vmem:[%s652 + $0x10] sm:$0xf]
      %v656 = vld [vmem:[%s652 + $0x18] sm:$0xf]
      %s657 = scalar_lea.vmem %s4, 4
      %v658 = vld [vmem:[%s657] sm:$0x1]
      %v659 = vlaneseq
      %v660 = vshrl.u32 %v659, 7
      %v661 = vsub.s32 0, %v660
      %v662 = vrot.slane %v658, %v661
      %v663 = vmul.f32 %v653, %v662
      %v664 = vmul.f32 %v654, %v662
      %v665 = vmul.f32 %v655, %v662
      %v666 = vmul.f32 %v656, %v662
      %v667 = vadd.f32 %v629, %v663
      %v668 = vadd.f32 %v630, %v664
      %v669 = vadd.f32 %v631, %v665
      %v670 = vadd.f32 %v632, %v666
      %s671 = scalar_lea.vmem [#allocation2], 120
      %v672 = vld [vmem:[%s671] sm:$0xf]
      %v673 = vld [vmem:[%s671 + $0x8] sm:$0xf]
      %v674 = vld [vmem:[%s671 + $0x10] sm:$0xf]
      %v675 = vld [vmem:[%s671 + $0x18] sm:$0xf]
      %v676 = vld [vmem:[%s638 + $0x1] sm:$0x1]
      %v677 = vlaneseq
      %v678 = vshrl.u32 %v677, 7
      %v679 = vsub.s32 0, %v678
      %v680 = vrot.slane %v676, %v679
      %v681 = vmul.f32 %v672, %v680
      %v682 = vmul.f32 %v673, %v680
      %v683 = vmul.f32 %v674, %v680
      %v684 = vmul.f32 %v675, %v680
      %v685 = vadd.f32 %v648, %v681
      %v686 = vadd.f32 %v649, %v682
      %v687 = vadd.f32 %v650, %v683
      %v688 = vadd.f32 %v651, %v684
      %s689 = scalar_lea.vmem %s300, 120
      %v690 = vld [vmem:[%s689] sm:$0xf]
      %v691 = vld [vmem:[%s689 + $0x8] sm:$0xf]
      %v692 = vld [vmem:[%s689 + $0x10] sm:$0xf]
      %v693 = vld [vmem:[%s689 + $0x18] sm:$0xf]
      %v694 = vld [vmem:[%s657 + $0x1] sm:$0x1]
      %v695 = vlaneseq
      %v696 = vshrl.u32 %v695, 7
      %v697 = vsub.s32 0, %v696
      %v698 = vrot.slane %v694, %v697
      %v699 = vmul.f32 %v690, %v698
      %v700 = vmul.f32 %v691, %v698
      %v701 = vmul.f32 %v692, %v698
      %v702 = vmul.f32 %v693, %v698
      %v703 = vadd.f32 %v667, %v699
      %v704 = vadd.f32 %v668, %v700
      %v705 = vadd.f32 %v669, %v701
      %v706 = vadd.f32 %v670, %v702
      %v707 = vld [vmem:[%s633 + $0x1] sm:$0xf]
      %v708 = vld [vmem:[%s633 + $0x9] sm:$0xf]
      %v709 = vld [vmem:[%s633 + $0x11] sm:$0xf]
      %v710 = vld [vmem:[%s633 + $0x19] sm:$0xf]
      %v711 = vld [vmem:[%s638 + $0x2] sm:$0x1]
      %v712 = vlaneseq
      %v713 = vshrl.u32 %v712, 7
      %v714 = vsub.s32 0, %v713
      %v715 = vrot.slane %v711, %v714
      %v716 = vmul.f32 %v707, %v715
      %v717 = vmul.f32 %v708, %v715
      %v718 = vmul.f32 %v709, %v715
      %v719 = vmul.f32 %v710, %v715
      %v720 = vadd.f32 %v685, %v716
      %v721 = vadd.f32 %v686, %v717
      %v722 = vadd.f32 %v687, %v718
      %v723 = vadd.f32 %v688, %v719
      %v724 = vld [vmem:[%s652 + $0x1] sm:$0xf]
      %v725 = vld [vmem:[%s652 + $0x9] sm:$0xf]
      %v726 = vld [vmem:[%s652 + $0x11] sm:$0xf]
      %v727 = vld [vmem:[%s652 + $0x19] sm:$0xf]
      %v728 = vld [vmem:[%s657 + $0x2] sm:$0x1]
      %v729 = vlaneseq
      %v730 = vshrl.u32 %v729, 7
      %v731 = vsub.s32 0, %v730
      %v732 = vrot.slane %v728, %v731
      %v733 = vmul.f32 %v724, %v732
      %v734 = vmul.f32 %v725, %v732
      %v735 = vmul.f32 %v726, %v732
      %v736 = vmul.f32 %v727, %v732
      %v737 = vadd.f32 %v703, %v733
      %v738 = vadd.f32 %v704, %v734
      %v739 = vadd.f32 %v705, %v735
      %v740 = vadd.f32 %v706, %v736
      %s741 = scalar_lea.vmem [#allocation2], 8
      %v742 = vld [vmem:[%s741] sm:$0xf]
      %v743 = vld [vmem:[%s741 + $0x8] sm:$0xf]
      %v744 = vld [vmem:[%s741 + $0x10] sm:$0xf]
      %v745 = vld [vmem:[%s741 + $0x18] sm:$0xf]
      %s746 = scalar_lea.vmem %s2, 8
      %v747 = vld [vmem:[%s746] sm:$0x1]
      %v748 = vlaneseq
      %v749 = vshrl.u32 %v748, 7
      %v750 = vsub.s32 0, %v749
      %v751 = vrot.slane %v747, %v750
      %v752 = vmul.f32 %v742, %v751
      %v753 = vmul.f32 %v743, %v751
      %v754 = vmul.f32 %v744, %v751
      %v755 = vmul.f32 %v745, %v751
      %v756 = vadd.f32 %v720, %v752
      %v757 = vadd.f32 %v721, %v753
      %v758 = vadd.f32 %v722, %v754
      %v759 = vadd.f32 %v723, %v755
      %s760 = scalar_lea.vmem %s300, 8
      %v761 = vld [vmem:[%s760] sm:$0xf]
      %v762 = vld [vmem:[%s760 + $0x8] sm:$0xf]
      %v763 = vld [vmem:[%s760 + $0x10] sm:$0xf]
      %v764 = vld [vmem:[%s760 + $0x18] sm:$0xf]
      %s765 = scalar_lea.vmem %s4, 8
      %v766 = vld [vmem:[%s765] sm:$0x1]
      %v767 = vlaneseq
      %v768 = vshrl.u32 %v767, 7
      %v769 = vsub.s32 0, %v768
      %v770 = vrot.slane %v766, %v769
      %v771 = vmul.f32 %v761, %v770
      %v772 = vmul.f32 %v762, %v770
      %v773 = vmul.f32 %v763, %v770
      %v774 = vmul.f32 %v764, %v770
      %v775 = vadd.f32 %v737, %v771
      %v776 = vadd.f32 %v738, %v772
      %v777 = vadd.f32 %v739, %v773
      %v778 = vadd.f32 %v740, %v774
      %s779 = scalar_lea.vmem [#allocation2], 48
      %v780 = vld [vmem:[%s779] sm:$0xf]
      %v781 = vld [vmem:[%s779 + $0x8] sm:$0xf]
      %v782 = vld [vmem:[%s779 + $0x10] sm:$0xf]
      %v783 = vld [vmem:[%s779 + $0x18] sm:$0xf]
      %v784 = vld [vmem:[%s746 + $0x1] sm:$0x1]
      %v785 = vlaneseq
      %v786 = vshrl.u32 %v785, 7
      %v787 = vsub.s32 0, %v786
      %v788 = vrot.slane %v784, %v787
      %v789 = vmul.f32 %v780, %v788
      %v790 = vmul.f32 %v781, %v788
      %v791 = vmul.f32 %v782, %v788
      %v792 = vmul.f32 %v783, %v788
      %v793 = vadd.f32 %v756, %v789
      %v794 = vadd.f32 %v757, %v790
      %v795 = vadd.f32 %v758, %v791
      %v796 = vadd.f32 %v759, %v792
      %s797 = scalar_lea.vmem %s300, 48
      %v798 = vld [vmem:[%s797] sm:$0xf]
      %v799 = vld [vmem:[%s797 + $0x8] sm:$0xf]
      %v800 = vld [vmem:[%s797 + $0x10] sm:$0xf]
      %v801 = vld [vmem:[%s797 + $0x18] sm:$0xf]
      %v802 = vld [vmem:[%s765 + $0x1] sm:$0x1]
      %v803 = vlaneseq
      %v804 = vshrl.u32 %v803, 7
      %v805 = vsub.s32 0, %v804
      %v806 = vrot.slane %v802, %v805
      %v807 = vmul.f32 %v798, %v806
      %v808 = vmul.f32 %v799, %v806
      %v809 = vmul.f32 %v800, %v806
      %v810 = vmul.f32 %v801, %v806
      %v811 = vadd.f32 %v775, %v807
      %v812 = vadd.f32 %v776, %v808
      %v813 = vadd.f32 %v777, %v809
      %v814 = vadd.f32 %v778, %v810
      %v815 = vld [vmem:[%s741 + $0x1] sm:$0xf]
      %v816 = vld [vmem:[%s741 + $0x9] sm:$0xf]
      %v817 = vld [vmem:[%s741 + $0x11] sm:$0xf]
      %v818 = vld [vmem:[%s741 + $0x19] sm:$0xf]
      %v819 = vld [vmem:[%s746 + $0x2] sm:$0x1]
      %v820 = vlaneseq
      %v821 = vshrl.u32 %v820, 7
      %v822 = vsub.s32 0, %v821
      %v823 = vrot.slane %v819, %v822
      %v824 = vmul.f32 %v815, %v823
      %v825 = vmul.f32 %v816, %v823
      %v826 = vmul.f32 %v817, %v823
      %v827 = vmul.f32 %v818, %v823
      %v828 = vadd.f32 %v793, %v824
      %v829 = vadd.f32 %v794, %v825
      %v830 = vadd.f32 %v795, %v826
      %v831 = vadd.f32 %v796, %v827
      %v832 = vld [vmem:[%s760 + $0x1] sm:$0xf]
      %v833 = vld [vmem:[%s760 + $0x9] sm:$0xf]
      %v834 = vld [vmem:[%s760 + $0x11] sm:$0xf]
      %v835 = vld [vmem:[%s760 + $0x19] sm:$0xf]
      %v836 = vld [vmem:[%s765 + $0x2] sm:$0x1]
      %v837 = vlaneseq
      %v838 = vshrl.u32 %v837, 7
      %v839 = vsub.s32 0, %v838
      %v840 = vrot.slane %v836, %v839
      %v841 = vmul.f32 %v832, %v840
      %v842 = vmul.f32 %v833, %v840
      %v843 = vmul.f32 %v834, %v840
      %v844 = vmul.f32 %v835, %v840
      %v845 = vadd.f32 %v811, %v841
      %v846 = vadd.f32 %v812, %v842
      %v847 = vadd.f32 %v813, %v843
      %v848 = vadd.f32 %v814, %v844
      %v849 = vld [vmem:[%s3] sm:$0x1]
      %v851 = vlaneseq
      %v852 = vshrl.u32 %v851, 7
      %v853 = vsub.s32 0, %v852
      %v854 = vrot.slane %v849, %v853
      %v856 = vadd.f32 %v828, %v854
      %v857 = vadd.f32 %v829, %v854
      %v858 = vadd.f32 %v830, %v854
      %v859 = vadd.f32 %v831, %v854
      %v860 = vld [vmem:[%s5] sm:$0x1]
      %v862 = vlaneseq
      %v863 = vshrl.u32 %v862, 7
      %v864 = vsub.s32 0, %v863
      %v865 = vrot.slane %v860, %v864
      %v867 = vadd.f32 %v845, %v865
      %v868 = vadd.f32 %v846, %v865
      %v869 = vadd.f32 %v847, %v865
      %v870 = vadd.f32 %v848, %v865
      %vm871 = vcmask 125952
      %872 = vst.msk [vmem:[#allocation3] sm:$0xf] %vm871, %v867
      %874 = vrot.lane.b32.xlu0 %v856, 16
      %v875 = vpop.permute.xlu0 %874
      %vm877 = vcmask 257152
      %878 = vst.msk [vmem:[#allocation3] sm:$0xf] %vm877, %v875
      %879 = vst.msk [vmem:[#allocation3 + $0x4] sm:$0xf] %vm871, %v868
      %881 = vrot.lane.b32.xlu0 %v857, 16
      %v882 = vpop.permute.xlu0 %881
      %884 = vst.msk [vmem:[#allocation3 + $0x4] sm:$0xf] %vm877, %v882
      %885 = vst.msk [vmem:[#allocation3 + $0x8] sm:$0xf] %vm871, %v869
      %887 = vrot.lane.b32.xlu0 %v858, 16
      %v888 = vpop.permute.xlu0 %887
      %890 = vst.msk [vmem:[#allocation3 + $0x8] sm:$0xf] %vm877, %v888
      %891 = vst.msk [vmem:[#allocation3 + $0xc] sm:$0xf] %vm871, %v870
      %893 = vrot.lane.b32.xlu0 %v859, 16
      %v894 = vpop.permute.xlu0 %893
      %896 = vst.msk [vmem:[#allocation3 + $0xc] sm:$0xf] %vm877, %v894
      %v897 = vld [vmem:[#allocation3] sm:$0xff]
      %v898 = vld [vmem:[#allocation3 + $0x8] sm:$0xff]
      %v899 = vpack.c.bf16 %v898, %v897
      %v900 = vld [vmem:[%s6] sm:$0xf]
      %v901 = vld [vmem:[%s6 + $0x4] sm:$0xf]
      %v902 = vld [vmem:[%s6 + $0x8] sm:$0xf]
      %v903 = vld [vmem:[%s6 + $0xc] sm:$0xf]
      %v904 = vld [vmem:[%s7] sm:$0x1]
      %v906 = vlaneseq
      %v907 = vshrl.u32 %v906, 7
      %v908 = vsub.s32 0, %v907
      %v909 = vrot.slane %v904, %v908
      %v915 = vunpack.c.l.b16 %v900
      %v916 = vunpack.c.l.b16 %v901
      %v917 = vunpack.c.l.b16 %v902
      %v918 = vunpack.c.l.b16 %v903
      %v919 = vpack.c.b16 %v916, %v915
      %v920 = vpack.c.b16 %v918, %v917
      %vm923 = vcmask 261120
      %v925 = vsel %vm923, %v899, 0
      %927 = vmatprep.subr.bf16.mxu0 0
      %928 = vmatpush1.bf16.msra.mxu0 %v919
      %929 = vmatprep.subr.bf16.mxu0 0
      %930 = vmatpush1.bf16.msra.mxu0 %v920
      %931 = vmatprep.subr.bf16.mxu0 0
      %932 = vmatpush1.bf16.msra.mxu0 0
      %933 = vmatprep.subr.bf16.mxu0 0
      %934 = vmatpush1.bf16.msra.mxu0 0
      %935 = vmatprep.subr.bf16.mxu0 0
      %936 = vmatpush1.bf16.msra.mxu0 0
      %937 = vmatprep.subr.bf16.mxu0 0
      %938 = vmatpush1.bf16.msra.mxu0 0
      %939 = vmatprep.subr.bf16.mxu0 0
      %940 = vmatpush1.bf16.msra.mxu0 0
      %941 = vmatprep.subr.bf16.mxu0 0
      %942 = vmatpush1.bf16.msra.mxu0 0
      %943 = vmatprep.subr.bf16.mxu0 0
      %944 = vmatpush1.bf16.msra.mxu0 0
      %945 = vmatprep.subr.bf16.mxu0 0
      %946 = vmatpush1.bf16.msra.mxu0 0
      %947 = vmatprep.subr.bf16.mxu0 0
      %948 = vmatpush1.bf16.msra.mxu0 0
      %949 = vmatprep.subr.bf16.mxu0 0
      %950 = vmatpush1.bf16.msra.mxu0 0
      %951 = vmatprep.subr.bf16.mxu0 0
      %952 = vmatpush1.bf16.msra.mxu0 0
      %953 = vmatprep.subr.bf16.mxu0 0
      %954 = vmatpush1.bf16.msra.mxu0 0
      %955 = vmatprep.subr.bf16.mxu0 0
      %956 = vmatpush1.bf16.msra.mxu0 0
      %957 = vmatprep.subr.bf16.mxu0 0
      %958 = vmatpush1.bf16.msra.mxu0 0
      %959 = vmatprep.mubr.bf16.mxu0 0
      %960 = vmatmul.mubr.bf16.gmra.mrb[0].mxu0 %v925
      %v961 = vpop.f32.mrb[0].mxu0
      %v962 = vadd.f32 %v909, %v961
      %v963 = vpop.f32.mrb[0].mxu0
      %v964 = vpop.f32.mrb[0].mxu0
      %v965 = vadd.f32 %v909, %v964
      %v966 = vpop.f32.mrb[0].mxu0
      %967 = vdwg.mxu0
      %v968 = vmax.f32 %v962, 0.0
      %v969 = vmax.f32 %v965, 0.0
      %970 = vst.msk [vmem:[%s305] sm:$0xff] %vm923, %v968
      %971 = vst.msk [vmem:[%s305 + $0x8] sm:$0xff] %vm923, %v969
      %p972 = scmp.lt.s32.totalorder %s19, 1
      %s973 = scalar_select %p972, %s19, 1
      %s974 = smul.addr %s973, 2
      %s975 = smul.addr %s974, 8
      %s976 = scalar_lea.vmem %s8, %s975
      // Predicated region
      $region53: #{shuffle_stage_forward.2} parent=51 // pred_check
        %p977 = pneg %p210
      $region54: #{shuffle_stage_forward.2} parent=51 // pred_check_branch
        %979 = sbr.rel (%p977) target = $region56
      $region55: #{shuffle_stage_forward.2} parent=51 // pred_region
        _
      $region56: #{shuffle_stage_forward.2} parent=51 // pred_fallthru
        _
    $region52: #{shuffle_stage_forward.2} parent=5 // pred_fallthru
      _
    %p980 = scmp.le.s32.totalorder 2, %s14
    // Predicated region
    $region57: #{shuffle_stage_forward.2} parent=5 // pred_check
      %p981 = pneg %p980
    $region58: #{shuffle_stage_forward.2} parent=5 // pred_check_branch
      %983 = sbr.rel (%p981) target = $region60
    $region59: #{shuffle_stage_forward.2} parent=5 // pred_region
      %s984 = ssub.s32 %s14, 2
      // Predicated region
      $region61: #{shuffle_stage_forward.2} parent=59 // pred_check
        %p985 = pneg %p216
      $region62: #{shuffle_stage_forward.2} parent=59 // pred_check_branch
        %987 = sbr.rel (%p985) target = $region64
      $region63: #{shuffle_stage_forward.2} parent=59 // pred_region
        %p988 = scmp.lt.s32.totalorder %s20, 1
        %s989 = scalar_select %p988, %s20, 1
        %s990 = smul.addr %s989, 2
        %s991 = smul.addr %s990, 8
        %s992 = scalar_lea.vmem %s8, %s991
      $region64: #{shuffle_stage_forward.2} parent=59 // pred_fallthru
        _
    $region60: #{shuffle_stage_forward.2} parent=5 // pred_fallthru
      _
  $region6: #{shuffle_stage_forward.2} parent=0 // loop_footer
    %s18 = sadd.s32 1, %s14
  $region7: #{shuffle_stage_forward.2} parent=0 // loop_footer_branch
    %13 = sbr.rel target = $region3
  $region8: #{shuffle_stage_forward.2} parent=0 // loop_exit
    _

</llo_original>
